<compile_context>
chip_gen: v7x
topology: tpu7x:2x2x1
jax: 0.10.0
libtpu: 0.0.40
codegen_flags: <defaults>
</compile_context>

<pallas_src>
import math

import jax
import jax.numpy as jnp
from jax.experimental import pallas as pl
from jax.experimental.pallas import tpu as pltpu


def _layernorm(x, gamma, beta, eps=1e-5):
    mean = jnp.mean(x, axis=-1, keepdims=True)
    var = jnp.mean((x - mean) ** 2, axis=-1, keepdims=True)
    return (x - mean) * jax.lax.rsqrt(var + eps) * gamma + beta


def _make_kernel(d_model, nhead, batch_block, seq_len, compute_dtype):
    head_dim = d_model // nhead
    rows = batch_block * seq_len
    use_approx_recip = compute_dtype == jnp.bfloat16

    def kernel(x_ref,
               wqkv_ref, bqkv_ref, wo_ref, bo_ref,
               w1_ref, b1_ref, w2_ref, b2_ref,
               g1_ref, be1_ref, g2_ref, be2_ref,
               o_ref):
        # ---- load + flatten rows (NB, S, E) -> (NB*S, E) ----------------
        x = x_ref[...].reshape(rows, d_model)            # float32
        xc = x.astype(compute_dtype)

        # ---- QKV projection (scale already folded into the Q columns) ----
        qkv = jnp.dot(xc, wqkv_ref[...],
                      preferred_element_type=jnp.float32) + bqkv_ref[0]
        qkv_c = qkv.astype(compute_dtype)                # (rows, 3E)

        # ---- batched multi-head self-attention ---------------------------
        # Build (NB*nhead, S, head_dim) operands; one batched einsum pair
        # covers every (batch element, head) at once.
        def gather(col0):
            return jnp.stack(
                [qkv_c[b * seq_len:(b + 1) * seq_len,
                       col0 + h * head_dim: col0 + (h + 1) * head_dim]
                 for b in range(batch_block) for h in range(nhead)],
                axis=0)

        qh = gather(0)
        kh = gather(d_model)
        vh = gather(2 * d_model)

        s = jnp.einsum('bqd,bkd->bqk', qh, kh,
                       preferred_element_type=jnp.float32)     # f32 scores
        s = s - jnp.max(s, axis=-1, keepdims=True)
        p = jnp.exp(s)                                         # EUP
        denom = jnp.sum(p, axis=-1, keepdims=True)             # (B', S, 1)
        o_heads = jnp.einsum('bqk,bkd->bqd', p.astype(compute_dtype), vh,
                             preferred_element_type=jnp.float32)
        # Normalize AFTER the PV matmul: S*hd elementwise work, not S*S.
        if use_approx_recip:
            o_heads = o_heads * pl.reciprocal(denom, approx=True)
        else:
            o_heads = o_heads / denom

        # Recombine (NB*nhead, S, hd) -> (rows, E)
        attn = jnp.concatenate(
            [jnp.concatenate([o_heads[b * nhead + h] for h in range(nhead)],
                             axis=-1)
             for b in range(batch_block)], axis=0)

        attn = jnp.dot(attn.astype(compute_dtype), wo_ref[...],
                       preferred_element_type=jnp.float32) + bo_ref[0]

        # ---- residual + LayerNorm 1 (f32 statistics) ---------------------
        src = _layernorm(x + attn, g1_ref[0], be1_ref[0])

        # ---- feed-forward -------------------------------------------------
        h1 = jnp.dot(src.astype(compute_dtype), w1_ref[...],
                     preferred_element_type=jnp.float32) + b1_ref[0]
        h1 = jnp.maximum(h1, 0.0)                        # relu
        ff = jnp.dot(h1.astype(compute_dtype), w2_ref[...],
                     preferred_element_type=jnp.float32) + b2_ref[0]

        # ---- residual + LayerNorm 2 (f32 statistics) ---------------------
        out = _layernorm(src + ff, g2_ref[0], be2_ref[0])
        o_ref[...] = out.reshape(batch_block, seq_len, d_model).astype(o_ref.dtype)

    return kernel


def _pick_batch_block(N, S, E, H, dff, budget_bytes=16 << 20):
    """Largest divisor of N whose per-step f32 working set fits the budget."""
    best = 1
    for nb in range(1, N + 1):
        if N % nb:
            continue
        rows = nb * S
        est = 4 * (rows * 3 * E * 2          # qkv + compute-dtype copy
                   + nb * H * S * S * 2      # scores + probs
                   + rows * dff * 2          # FFN hidden (+ relu copy)
                   + rows * E * 8)           # x, attn, residuals, heads, out
        if est <= budget_bytes:
            best = nb
    return best


def transformer_encoder_layer(src, params, *, nhead,
                              compute_dtype=jnp.float32, batch_block=None):
    """src: (S, N, E) float32 — same layout as the PyTorch module."""
    S, N, E = src.shape
    dff = params["w1"].shape[0]
    head_dim = E // nhead
    scale = 1.0 / math.sqrt(head_dim)

    x = jnp.transpose(src, (1, 0, 2))  # (N, S, E) for the kernel

    # Batch elements per grid step (amortize grid overhead, keep VMEM sane).
    if batch_block is None:
        batch_block = _pick_batch_block(N, S, E, nhead, dff)
    if N % batch_block:
        batch_block = 1
    NB = batch_block
    grid = (N // NB,)

    # Fold the attention scale into the Q part of the in-projection, then
    # pre-transpose every weight once so all in-kernel matmuls are x @ W.
    wqkv = jnp.concatenate([params["wqkv"][:E] * scale, params["wqkv"][E:]], axis=0)
    bqkv = jnp.concatenate([params["bqkv"][:E] * scale, params["bqkv"][E:]], axis=0)

    cdt = compute_dtype
    wqkv_t = wqkv.T.astype(cdt)            # (E, 3E)
    wo_t = params["wo"].T.astype(cdt)      # (E, E)
    w1_t = params["w1"].T.astype(cdt)      # (E, dff)
    w2_t = params["w2"].T.astype(cdt)      # (dff, E)

    args = (
        x,
        wqkv_t, bqkv.reshape(1, -1),
        wo_t, params["bo"].reshape(1, -1),
        w1_t, params["b1"].reshape(1, -1),
        w2_t, params["b2"].reshape(1, -1),
        params["g1"].reshape(1, -1), params["be1"].reshape(1, -1),
        params["g2"].reshape(1, -1), params["be2"].reshape(1, -1),
    )

    def full(shape):
        # grid-invariant weight blocks: same block index every grid step,
        # so Pallas keeps them resident (no re-DMA per step).
        return pl.BlockSpec(shape, lambda b: (0,) * len(shape))

    in_specs = [
        pl.BlockSpec((NB, S, E), lambda b: (b, 0, 0)),
        full((E, 3 * E)), full((1, 3 * E)),
        full((E, E)), full((1, E)),
        full((E, dff)), full((1, dff)),
        full((dff, E)), full((1, E)),
        full((1, E)), full((1, E)),
        full((1, E)), full((1, E)),
    ]

    w_bytes = ((wqkv_t.size + wo_t.size + w1_t.size + w2_t.size)
               * jnp.dtype(cdt).itemsize)
    flops = 2 * N * S * (4 * E * E + 2 * S * E + 2 * E * dff)
    cost = pl.CostEstimate(
        flops=int(flops),
        transcendentals=int(N * nhead * S * S + 2 * N * S),
        bytes_accessed=int(2 * N * S * E * 4 + w_bytes),
    )

    out = pl.pallas_call(
        _make_kernel(E, nhead, NB, S, cdt),
        out_shape=jax.ShapeDtypeStruct((N, S, E), src.dtype),
        grid=grid,
        in_specs=in_specs,
        out_specs=pl.BlockSpec((NB, S, E), lambda b: (b, 0, 0)),
        compiler_params=pltpu.CompilerParams(
            dimension_semantics=("parallel",),
            vmem_limit_bytes=48 * 1024 * 1024),
        cost_estimate=cost,
    )(*args)

    return jnp.transpose(out, (1, 0, 2))  # back to (S, N, E)


def reference(src, params, *, nhead):
    """Pure-JAX reference of the same forward pass (for validation)."""
    S, N, E = src.shape
    hd = E // nhead
    x = src  # (S, N, E)
    qkv = jnp.einsum("snE,FE->snF", x, params["wqkv"]) + params["bqkv"]
    q, k, v = jnp.split(qkv, 3, axis=-1)
    q = q * (1.0 / math.sqrt(hd))

    def split_heads(t):  # (S, N, E) -> (N, H, S, hd)
        return jnp.transpose(t.reshape(S, N, nhead, hd), (1, 2, 0, 3))

    qh, kh, vh = split_heads(q), split_heads(k), split_heads(v)
    scores = jnp.einsum("nhqd,nhkd->nhqk", qh, kh)
    p = jax.nn.softmax(scores, axis=-1)
    o = jnp.einsum("nhqk,nhkd->nhqd", p, vh)
    o = jnp.transpose(o, (2, 0, 1, 3)).reshape(S, N, E)
    attn = jnp.einsum("snE,FE->snF", o, params["wo"]) + params["bo"]

    src1 = _layernorm(x + attn, params["g1"], params["be1"])
    h1 = jax.nn.relu(jnp.einsum("snE,FE->snF", src1, params["w1"]) + params["b1"])
    ff = jnp.einsum("snF,EF->snE", h1, params["w2"]) + params["b2"]
    return _layernorm(src1 + ff, params["g2"], params["be2"])


def init_params(key, d_model, nhead, dim_feedforward):
    ks = jax.random.split(key, 8)
    s = 0.05
    return {
        "wqkv": jax.random.normal(ks[0], (3 * d_model, d_model), jnp.float32) * s,
        "bqkv": jax.random.normal(ks[1], (3 * d_model,), jnp.float32) * s,
        "wo":   jax.random.normal(ks[2], (d_model, d_model), jnp.float32) * s,
        "bo":   jax.random.normal(ks[3], (d_model,), jnp.float32) * s,
        "w1":   jax.random.normal(ks[4], (dim_feedforward, d_model), jnp.float32) * s,
        "b1":   jax.random.normal(ks[5], (dim_feedforward,), jnp.float32) * s,
        "w2":   jax.random.normal(ks[6], (d_model, dim_feedforward), jnp.float32) * s,
        "b2":   jax.random.normal(ks[7], (d_model,), jnp.float32) * s,
        "g1":   jnp.ones((d_model,), jnp.float32),
        "be1":  jnp.zeros((d_model,), jnp.float32),
        "g2":   jnp.ones((d_model,), jnp.float32),
        "be2":  jnp.zeros((d_model,), jnp.float32),
    }


if __name__ == "__main__":
    S, N, d_model, nhead, dff = 8, 2, 32, 4, 64

    key = jax.random.PRNGKey(0)
    k_src, k_par = jax.random.split(key)
    src = jax.random.normal(k_src, (S, N, d_model), jnp.float32)
    params = init_params(k_par, d_model, nhead, dff)

    ref = reference(src, params, nhead=nhead)

    # Full-precision path (tight check against the pure-JAX reference).
    out = transformer_encoder_layer(src, params, nhead=nhead)
    out = jax.block_until_ready(out)
    assert out.shape == (S, N, d_model)
    assert jnp.allclose(out, ref, atol=2e-4, rtol=2e-4), "f32 mismatch vs reference"

    # bf16 MXU path (v6e/v7x fast path): matmul inputs in bf16, softmax and
    # LayerNorm statistics in f32.
    out_bf16 = transformer_encoder_layer(src, params, nhead=nhead,
                                         compute_dtype=jnp.bfloat16)
    out_bf16 = jax.block_until_ready(out_bf16)
    assert jnp.allclose(out_bf16, ref, atol=3e-2, rtol=3e-2), "bf16 mismatch vs reference"

    print("KERNEL_OK")
</pallas_src>

<mosaic_0001>
module attributes {stable_mosaic.version = 11 : i64} {
  func.func @kernel(%arg0: i32, %arg1: memref<2x8x32xf32, #tpu.memory_space<vmem>>, %arg2: memref<32x96xf32, #tpu.memory_space<vmem>>, %arg3: memref<1x96xf32, #tpu.memory_space<vmem>>, %arg4: memref<32x32xf32, #tpu.memory_space<vmem>>, %arg5: memref<1x32xf32, #tpu.memory_space<vmem>>, %arg6: memref<32x64xf32, #tpu.memory_space<vmem>>, %arg7: memref<1x64xf32, #tpu.memory_space<vmem>>, %arg8: memref<64x32xf32, #tpu.memory_space<vmem>>, %arg9: memref<1x32xf32, #tpu.memory_space<vmem>>, %arg10: memref<1x32xf32, #tpu.memory_space<vmem>>, %arg11: memref<1x32xf32, #tpu.memory_space<vmem>>, %arg12: memref<1x32xf32, #tpu.memory_space<vmem>>, %arg13: memref<1x32xf32, #tpu.memory_space<vmem>>, %arg14: memref<2x8x32xf32, #tpu.memory_space<vmem>>) attributes {dimension_semantics = [#tpu.dimension_semantics<parallel>], iteration_bounds = array<i64: 1>, scalar_prefetch = 0 : i64, scratch_operands = 0 : i64, tpu.core_type = #tpu.core_type<tc>, window_params = [{transform_indices = @transform_0, window_bounds = array<i64: 2, 8, 32>}, {pipeline_mode = #tpu.pipeline_mode<synchronous>, transform_indices = @transform_1, window_bounds = array<i64: 32, 96>}, {pipeline_mode = #tpu.pipeline_mode<synchronous>, transform_indices = @transform_2, window_bounds = array<i64: 1, 96>}, {pipeline_mode = #tpu.pipeline_mode<synchronous>, transform_indices = @transform_3, window_bounds = array<i64: 32, 32>}, {pipeline_mode = #tpu.pipeline_mode<synchronous>, transform_indices = @transform_4, window_bounds = array<i64: 1, 32>}, {pipeline_mode = #tpu.pipeline_mode<synchronous>, transform_indices = @transform_5, window_bounds = array<i64: 32, 64>}, {pipeline_mode = #tpu.pipeline_mode<synchronous>, transform_indices = @transform_6, window_bounds = array<i64: 1, 64>}, {pipeline_mode = #tpu.pipeline_mode<synchronous>, transform_indices = @transform_7, window_bounds = array<i64: 64, 32>}, {pipeline_mode = #tpu.pipeline_mode<synchronous>, transform_indices = @transform_8, window_bounds = array<i64: 1, 32>}, {pipeline_mode = #tpu.pipeline_mode<synchronous>, transform_indices = @transform_9, window_bounds = array<i64: 1, 32>}, {pipeline_mode = #tpu.pipeline_mode<synchronous>, transform_indices = @transform_10, window_bounds = array<i64: 1, 32>}, {pipeline_mode = #tpu.pipeline_mode<synchronous>, transform_indices = @transform_11, window_bounds = array<i64: 1, 32>}, {pipeline_mode = #tpu.pipeline_mode<synchronous>, transform_indices = @transform_12, window_bounds = array<i64: 1, 32>}, {transform_indices = @transform_13, window_bounds = array<i64: 2, 8, 32>}]} {
    %c0 = arith.constant 0 : index
    %c0_0 = arith.constant 0 : index
    %c0_1 = arith.constant 0 : index
    %0 = vector.load %arg1[%c0, %c0_0, %c0_1] : memref<2x8x32xf32, #tpu.memory_space<vmem>>, vector<2x8x32xf32>
    %1 = vector.shape_cast %0 : vector<2x8x32xf32> to vector<16x32xf32>
    %c0_2 = arith.constant 0 : index
    %c0_3 = arith.constant 0 : index
    %2 = vector.load %arg2[%c0_2, %c0_3] : memref<32x96xf32, #tpu.memory_space<vmem>>, vector<32x96xf32>
    %cst = arith.constant dense<0.000000e+00> : vector<16x96xf32>
    %3 = tpu.matmul %1, %2, %cst {dimension_numbers = #tpu.dot_dimension_numbers<[1], [0], [0], [1], [0, 0, 1, 1], [], []>} : vector<16x32xf32>, vector<32x96xf32>, vector<16x96xf32> -> vector<16x96xf32>
    %c0_4 = arith.constant 0 : index
    %c0_5 = arith.constant 0 : index
    %4 = vector.load %arg3[%c0_4, %c0_5] : memref<1x96xf32, #tpu.memory_space<vmem>>, vector<1x96xf32>
    %5 = vector.shape_cast %4 : vector<1x96xf32> to vector<96xf32>
    %6 = vector.shape_cast %5 : vector<96xf32> to vector<1x96xf32>
    %7 = vector.broadcast %6 : vector<1x96xf32> to vector<16x96xf32>
    %8 = arith.addf %3, %7 : vector<16x96xf32>
    %9 = vector.extract_strided_slice %8 {offsets = [0, 0], sizes = [8, 8], strides = [1, 1]} : vector<16x96xf32> to vector<8x8xf32>
    %10 = vector.extract_strided_slice %8 {offsets = [0, 8], sizes = [8, 8], strides = [1, 1]} : vector<16x96xf32> to vector<8x8xf32>
    %11 = vector.extract_strided_slice %8 {offsets = [0, 16], sizes = [8, 8], strides = [1, 1]} : vector<16x96xf32> to vector<8x8xf32>
    %12 = vector.extract_strided_slice %8 {offsets = [0, 24], sizes = [8, 8], strides = [1, 1]} : vector<16x96xf32> to vector<8x8xf32>
    %13 = vector.extract_strided_slice %8 {offsets = [8, 0], sizes = [8, 8], strides = [1, 1]} : vector<16x96xf32> to vector<8x8xf32>
    %14 = vector.extract_strided_slice %8 {offsets = [8, 8], sizes = [8, 8], strides = [1, 1]} : vector<16x96xf32> to vector<8x8xf32>
    %15 = vector.extract_strided_slice %8 {offsets = [8, 16], sizes = [8, 8], strides = [1, 1]} : vector<16x96xf32> to vector<8x8xf32>
    %16 = vector.extract_strided_slice %8 {offsets = [8, 24], sizes = [8, 8], strides = [1, 1]} : vector<16x96xf32> to vector<8x8xf32>
    %17 = vector.shape_cast %9 : vector<8x8xf32> to vector<1x8x8xf32>
    %18 = vector.shape_cast %10 : vector<8x8xf32> to vector<1x8x8xf32>
    %19 = vector.shape_cast %11 : vector<8x8xf32> to vector<1x8x8xf32>
    %20 = vector.shape_cast %12 : vector<8x8xf32> to vector<1x8x8xf32>
    %21 = vector.shape_cast %13 : vector<8x8xf32> to vector<1x8x8xf32>
    %22 = vector.shape_cast %14 : vector<8x8xf32> to vector<1x8x8xf32>
    %23 = vector.shape_cast %15 : vector<8x8xf32> to vector<1x8x8xf32>
    %24 = vector.shape_cast %16 : vector<8x8xf32> to vector<1x8x8xf32>
    %25 = tpu.concatenate %17, %18, %19, %20, %21, %22, %23, %24 in 0 : vector<1x8x8xf32>, vector<1x8x8xf32>, vector<1x8x8xf32>, vector<1x8x8xf32>, vector<1x8x8xf32>, vector<1x8x8xf32>, vector<1x8x8xf32>, vector<1x8x8xf32> -> vector<8x8x8xf32>
    %26 = vector.extract_strided_slice %8 {offsets = [0, 32], sizes = [8, 8], strides = [1, 1]} : vector<16x96xf32> to vector<8x8xf32>
    %27 = vector.extract_strided_slice %8 {offsets = [0, 40], sizes = [8, 8], strides = [1, 1]} : vector<16x96xf32> to vector<8x8xf32>
    %28 = vector.extract_strided_slice %8 {offsets = [0, 48], sizes = [8, 8], strides = [1, 1]} : vector<16x96xf32> to vector<8x8xf32>
    %29 = vector.extract_strided_slice %8 {offsets = [0, 56], sizes = [8, 8], strides = [1, 1]} : vector<16x96xf32> to vector<8x8xf32>
    %30 = vector.extract_strided_slice %8 {offsets = [8, 32], sizes = [8, 8], strides = [1, 1]} : vector<16x96xf32> to vector<8x8xf32>
    %31 = vector.extract_strided_slice %8 {offsets = [8, 40], sizes = [8, 8], strides = [1, 1]} : vector<16x96xf32> to vector<8x8xf32>
    %32 = vector.extract_strided_slice %8 {offsets = [8, 48], sizes = [8, 8], strides = [1, 1]} : vector<16x96xf32> to vector<8x8xf32>
    %33 = vector.extract_strided_slice %8 {offsets = [8, 56], sizes = [8, 8], strides = [1, 1]} : vector<16x96xf32> to vector<8x8xf32>
    %34 = vector.shape_cast %26 : vector<8x8xf32> to vector<1x8x8xf32>
    %35 = vector.shape_cast %27 : vector<8x8xf32> to vector<1x8x8xf32>
    %36 = vector.shape_cast %28 : vector<8x8xf32> to vector<1x8x8xf32>
    %37 = vector.shape_cast %29 : vector<8x8xf32> to vector<1x8x8xf32>
    %38 = vector.shape_cast %30 : vector<8x8xf32> to vector<1x8x8xf32>
    %39 = vector.shape_cast %31 : vector<8x8xf32> to vector<1x8x8xf32>
    %40 = vector.shape_cast %32 : vector<8x8xf32> to vector<1x8x8xf32>
    %41 = vector.shape_cast %33 : vector<8x8xf32> to vector<1x8x8xf32>
    %42 = tpu.concatenate %34, %35, %36, %37, %38, %39, %40, %41 in 0 : vector<1x8x8xf32>, vector<1x8x8xf32>, vector<1x8x8xf32>, vector<1x8x8xf32>, vector<1x8x8xf32>, vector<1x8x8xf32>, vector<1x8x8xf32>, vector<1x8x8xf32> -> vector<8x8x8xf32>
    %43 = vector.extract_strided_slice %8 {offsets = [0, 64], sizes = [8, 8], strides = [1, 1]} : vector<16x96xf32> to vector<8x8xf32>
    %44 = vector.extract_strided_slice %8 {offsets = [0, 72], sizes = [8, 8], strides = [1, 1]} : vector<16x96xf32> to vector<8x8xf32>
    %45 = vector.extract_strided_slice %8 {offsets = [0, 80], sizes = [8, 8], strides = [1, 1]} : vector<16x96xf32> to vector<8x8xf32>
    %46 = vector.extract_strided_slice %8 {offsets = [0, 88], sizes = [8, 8], strides = [1, 1]} : vector<16x96xf32> to vector<8x8xf32>
    %47 = vector.extract_strided_slice %8 {offsets = [8, 64], sizes = [8, 8], strides = [1, 1]} : vector<16x96xf32> to vector<8x8xf32>
    %48 = vector.extract_strided_slice %8 {offsets = [8, 72], sizes = [8, 8], strides = [1, 1]} : vector<16x96xf32> to vector<8x8xf32>
    %49 = vector.extract_strided_slice %8 {offsets = [8, 80], sizes = [8, 8], strides = [1, 1]} : vector<16x96xf32> to vector<8x8xf32>
    %50 = vector.extract_strided_slice %8 {offsets = [8, 88], sizes = [8, 8], strides = [1, 1]} : vector<16x96xf32> to vector<8x8xf32>
    %51 = vector.shape_cast %43 : vector<8x8xf32> to vector<1x8x8xf32>
    %52 = vector.shape_cast %44 : vector<8x8xf32> to vector<1x8x8xf32>
    %53 = vector.shape_cast %45 : vector<8x8xf32> to vector<1x8x8xf32>
    %54 = vector.shape_cast %46 : vector<8x8xf32> to vector<1x8x8xf32>
    %55 = vector.shape_cast %47 : vector<8x8xf32> to vector<1x8x8xf32>
    %56 = vector.shape_cast %48 : vector<8x8xf32> to vector<1x8x8xf32>
    %57 = vector.shape_cast %49 : vector<8x8xf32> to vector<1x8x8xf32>
    %58 = vector.shape_cast %50 : vector<8x8xf32> to vector<1x8x8xf32>
    %59 = tpu.concatenate %51, %52, %53, %54, %55, %56, %57, %58 in 0 : vector<1x8x8xf32>, vector<1x8x8xf32>, vector<1x8x8xf32>, vector<1x8x8xf32>, vector<1x8x8xf32>, vector<1x8x8xf32>, vector<1x8x8xf32>, vector<1x8x8xf32> -> vector<8x8x8xf32>
    "tpu.trace_start"() <{level = 10 : i32, message = "bqd,bkd->bqk"}> : () -> ()
    %cst_6 = arith.constant dense<0.000000e+00> : vector<8x8x8xf32>
    %60 = tpu.matmul %25, %42, %cst_6 {dimension_numbers = #tpu.dot_dimension_numbers<[2], [2], [1], [1], [0, 0, 0, 1, 1, 1], [0], [0]>} : vector<8x8x8xf32>, vector<8x8x8xf32>, vector<8x8x8xf32> -> vector<8x8x8xf32>
    "tpu.trace_stop"() : () -> ()
    %cst_7 = arith.constant dense<0xFF800000> : vector<8x8xf32>
    %61 = vector.multi_reduction <maximumf>, %60, %cst_7 [2] : vector<8x8x8xf32> to vector<8x8xf32>
    %62 = vector.shape_cast %61 : vector<8x8xf32> to vector<8x8x1xf32>
    %63 = vector.broadcast %62 : vector<8x8x1xf32> to vector<8x8x8xf32>
    %64 = arith.subf %60, %63 : vector<8x8x8xf32>
    %65 = math.exp %64 : vector<8x8x8xf32>
    %cst_8 = arith.constant dense<0.000000e+00> : vector<8x8xf32>
    %66 = vector.multi_reduction <add>, %65, %cst_8 [2] : vector<8x8x8xf32> to vector<8x8xf32>
    %67 = vector.shape_cast %66 : vector<8x8xf32> to vector<8x8x1xf32>
    "tpu.trace_start"() <{level = 10 : i32, message = "bqk,bkd->bqd"}> : () -> ()
    %cst_9 = arith.constant dense<0.000000e+00> : vector<8x8x8xf32>
    %68 = tpu.matmul %65, %59, %cst_9 {dimension_numbers = #tpu.dot_dimension_numbers<[2], [1], [1], [2], [0, 0, 0, 1, 1, 2], [0], [0]>} : vector<8x8x8xf32>, vector<8x8x8xf32>, vector<8x8x8xf32> -> vector<8x8x8xf32>
    "tpu.trace_stop"() : () -> ()
    %69 = vector.broadcast %67 : vector<8x8x1xf32> to vector<8x8x8xf32>
    %70 = arith.divf %68, %69 : vector<8x8x8xf32>
    %71 = vector.extract_strided_slice %70 {offsets = [0, 0, 0], sizes = [1, 8, 8], strides = [1, 1, 1]} : vector<8x8x8xf32> to vector<1x8x8xf32>
    %72 = vector.shape_cast %71 : vector<1x8x8xf32> to vector<8x8xf32>
    %73 = vector.extract_strided_slice %70 {offsets = [1, 0, 0], sizes = [1, 8, 8], strides = [1, 1, 1]} : vector<8x8x8xf32> to vector<1x8x8xf32>
    %74 = vector.shape_cast %73 : vector<1x8x8xf32> to vector<8x8xf32>
    %75 = vector.extract_strided_slice %70 {offsets = [2, 0, 0], sizes = [1, 8, 8], strides = [1, 1, 1]} : vector<8x8x8xf32> to vector<1x8x8xf32>
    %76 = vector.shape_cast %75 : vector<1x8x8xf32> to vector<8x8xf32>
    %77 = vector.extract_strided_slice %70 {offsets = [3, 0, 0], sizes = [1, 8, 8], strides = [1, 1, 1]} : vector<8x8x8xf32> to vector<1x8x8xf32>
    %78 = vector.shape_cast %77 : vector<1x8x8xf32> to vector<8x8xf32>
    %79 = tpu.concatenate %72, %74, %76, %78 in 1 : vector<8x8xf32>, vector<8x8xf32>, vector<8x8xf32>, vector<8x8xf32> -> vector<8x32xf32>
    %80 = vector.extract_strided_slice %70 {offsets = [4, 0, 0], sizes = [1, 8, 8], strides = [1, 1, 1]} : vector<8x8x8xf32> to vector<1x8x8xf32>
    %81 = vector.shape_cast %80 : vector<1x8x8xf32> to vector<8x8xf32>
    %82 = vector.extract_strided_slice %70 {offsets = [5, 0, 0], sizes = [1, 8, 8], strides = [1, 1, 1]} : vector<8x8x8xf32> to vector<1x8x8xf32>
    %83 = vector.shape_cast %82 : vector<1x8x8xf32> to vector<8x8xf32>
    %84 = vector.extract_strided_slice %70 {offsets = [6, 0, 0], sizes = [1, 8, 8], strides = [1, 1, 1]} : vector<8x8x8xf32> to vector<1x8x8xf32>
    %85 = vector.shape_cast %84 : vector<1x8x8xf32> to vector<8x8xf32>
    %86 = vector.extract_strided_slice %70 {offsets = [7, 0, 0], sizes = [1, 8, 8], strides = [1, 1, 1]} : vector<8x8x8xf32> to vector<1x8x8xf32>
    %87 = vector.shape_cast %86 : vector<1x8x8xf32> to vector<8x8xf32>
    %88 = tpu.concatenate %81, %83, %85, %87 in 1 : vector<8x8xf32>, vector<8x8xf32>, vector<8x8xf32>, vector<8x8xf32> -> vector<8x32xf32>
    %89 = tpu.concatenate %79, %88 in 0 : vector<8x32xf32>, vector<8x32xf32> -> vector<16x32xf32>
    %c0_10 = arith.constant 0 : index
    %c0_11 = arith.constant 0 : index
    %90 = vector.load %arg4[%c0_10, %c0_11] : memref<32x32xf32, #tpu.memory_space<vmem>>, vector<32x32xf32>
    %cst_12 = arith.constant dense<0.000000e+00> : vector<16x32xf32>
    %91 = tpu.matmul %89, %90, %cst_12 {dimension_numbers = #tpu.dot_dimension_numbers<[1], [0], [0], [1], [0, 0, 1, 1], [], []>} : vector<16x32xf32>, vector<32x32xf32>, vector<16x32xf32> -> vector<16x32xf32>
    %c0_13 = arith.constant 0 : index
    %c0_14 = arith.constant 0 : index
    %92 = vector.load %arg5[%c0_13, %c0_14] : memref<1x32xf32, #tpu.memory_space<vmem>>, vector<1x32xf32>
    %93 = vector.shape_cast %92 : vector<1x32xf32> to vector<32xf32>
    %94 = vector.shape_cast %93 : vector<32xf32> to vector<1x32xf32>
    %95 = vector.broadcast %94 : vector<1x32xf32> to vector<16x32xf32>
    %96 = arith.addf %91, %95 : vector<16x32xf32>
    %97 = arith.addf %1, %96 : vector<16x32xf32>
    %c0_15 = arith.constant 0 : index
    %c0_16 = arith.constant 0 : index
    %98 = vector.load %arg10[%c0_15, %c0_16] : memref<1x32xf32, #tpu.memory_space<vmem>>, vector<1x32xf32>
    %99 = vector.shape_cast %98 : vector<1x32xf32> to vector<32xf32>
    %c0_17 = arith.constant 0 : index
    %c0_18 = arith.constant 0 : index
    %100 = vector.load %arg11[%c0_17, %c0_18] : memref<1x32xf32, #tpu.memory_space<vmem>>, vector<1x32xf32>
    %101 = vector.shape_cast %100 : vector<1x32xf32> to vector<32xf32>
    %cst_19 = arith.constant dense<0.000000e+00> : vector<16xf32>
    %102 = vector.multi_reduction <add>, %97, %cst_19 [1] : vector<16x32xf32> to vector<16xf32>
    %103 = vector.shape_cast %102 : vector<16xf32> to vector<16x1xf32>
    %cst_20 = arith.constant 3.200000e+01 : f32
    %104 = vector.broadcast %cst_20 : f32 to vector<16x1xf32>
    %105 = arith.divf %103, %104 : vector<16x1xf32>
    %106 = vector.broadcast %105 : vector<16x1xf32> to vector<16x32xf32>
    %107 = arith.subf %97, %106 : vector<16x32xf32>
    %108 = arith.mulf %107, %107 : vector<16x32xf32>
    %cst_21 = arith.constant dense<0.000000e+00> : vector<16xf32>
    %109 = vector.multi_reduction <add>, %108, %cst_21 [1] : vector<16x32xf32> to vector<16xf32>
    %110 = vector.shape_cast %109 : vector<16xf32> to vector<16x1xf32>
    %cst_22 = arith.constant 3.200000e+01 : f32
    %111 = vector.broadcast %cst_22 : f32 to vector<16x1xf32>
    %112 = arith.divf %110, %111 : vector<16x1xf32>
    %113 = vector.broadcast %105 : vector<16x1xf32> to vector<16x32xf32>
    %114 = arith.subf %97, %113 : vector<16x32xf32>
    %cst_23 = arith.constant 9.99999974E-6 : f32
    %115 = vector.broadcast %cst_23 : f32 to vector<16x1xf32>
    %116 = arith.addf %112, %115 : vector<16x1xf32>
    %117 = math.rsqrt %116 : vector<16x1xf32>
    %118 = vector.broadcast %117 : vector<16x1xf32> to vector<16x32xf32>
    %119 = arith.mulf %114, %118 : vector<16x32xf32>
    %120 = vector.shape_cast %99 : vector<32xf32> to vector<1x32xf32>
    %121 = vector.broadcast %120 : vector<1x32xf32> to vector<16x32xf32>
    %122 = arith.mulf %119, %121 : vector<16x32xf32>
    %123 = vector.shape_cast %101 : vector<32xf32> to vector<1x32xf32>
    %124 = vector.broadcast %123 : vector<1x32xf32> to vector<16x32xf32>
    %125 = arith.addf %122, %124 : vector<16x32xf32>
    %c0_24 = arith.constant 0 : index
    %c0_25 = arith.constant 0 : index
    %126 = vector.load %arg6[%c0_24, %c0_25] : memref<32x64xf32, #tpu.memory_space<vmem>>, vector<32x64xf32>
    %cst_26 = arith.constant dense<0.000000e+00> : vector<16x64xf32>
    %127 = tpu.matmul %125, %126, %cst_26 {dimension_numbers = #tpu.dot_dimension_numbers<[1], [0], [0], [1], [0, 0, 1, 1], [], []>} : vector<16x32xf32>, vector<32x64xf32>, vector<16x64xf32> -> vector<16x64xf32>
    %c0_27 = arith.constant 0 : index
    %c0_28 = arith.constant 0 : index
    %128 = vector.load %arg7[%c0_27, %c0_28] : memref<1x64xf32, #tpu.memory_space<vmem>>, vector<1x64xf32>
    %129 = vector.shape_cast %128 : vector<1x64xf32> to vector<64xf32>
    %130 = vector.shape_cast %129 : vector<64xf32> to vector<1x64xf32>
    %131 = vector.broadcast %130 : vector<1x64xf32> to vector<16x64xf32>
    %132 = arith.addf %127, %131 : vector<16x64xf32>
    %cst_29 = arith.constant 0.000000e+00 : f32
    %133 = vector.broadcast %cst_29 : f32 to vector<16x64xf32>
    %134 = arith.maximumf %132, %133 : vector<16x64xf32>
    %c0_30 = arith.constant 0 : index
    %c0_31 = arith.constant 0 : index
    %135 = vector.load %arg8[%c0_30, %c0_31] : memref<64x32xf32, #tpu.memory_space<vmem>>, vector<64x32xf32>
    %cst_32 = arith.constant dense<0.000000e+00> : vector<16x32xf32>
    %136 = tpu.matmul %134, %135, %cst_32 {dimension_numbers = #tpu.dot_dimension_numbers<[1], [0], [0], [1], [0, 0, 1, 1], [], []>} : vector<16x64xf32>, vector<64x32xf32>, vector<16x32xf32> -> vector<16x32xf32>
    %c0_33 = arith.constant 0 : index
    %c0_34 = arith.constant 0 : index
    %137 = vector.load %arg9[%c0_33, %c0_34] : memref<1x32xf32, #tpu.memory_space<vmem>>, vector<1x32xf32>
    %138 = vector.shape_cast %137 : vector<1x32xf32> to vector<32xf32>
    %139 = vector.shape_cast %138 : vector<32xf32> to vector<1x32xf32>
    %140 = vector.broadcast %139 : vector<1x32xf32> to vector<16x32xf32>
    %141 = arith.addf %136, %140 : vector<16x32xf32>
    %142 = arith.addf %125, %141 : vector<16x32xf32>
    %c0_35 = arith.constant 0 : index
    %c0_36 = arith.constant 0 : index
    %143 = vector.load %arg12[%c0_35, %c0_36] : memref<1x32xf32, #tpu.memory_space<vmem>>, vector<1x32xf32>
    %144 = vector.shape_cast %143 : vector<1x32xf32> to vector<32xf32>
    %c0_37 = arith.constant 0 : index
    %c0_38 = arith.constant 0 : index
    %145 = vector.load %arg13[%c0_37, %c0_38] : memref<1x32xf32, #tpu.memory_space<vmem>>, vector<1x32xf32>
    %146 = vector.shape_cast %145 : vector<1x32xf32> to vector<32xf32>
    %cst_39 = arith.constant dense<0.000000e+00> : vector<16xf32>
    %147 = vector.multi_reduction <add>, %142, %cst_39 [1] : vector<16x32xf32> to vector<16xf32>
    %148 = vector.shape_cast %147 : vector<16xf32> to vector<16x1xf32>
    %cst_40 = arith.constant 3.200000e+01 : f32
    %149 = vector.broadcast %cst_40 : f32 to vector<16x1xf32>
    %150 = arith.divf %148, %149 : vector<16x1xf32>
    %151 = vector.broadcast %150 : vector<16x1xf32> to vector<16x32xf32>
    %152 = arith.subf %142, %151 : vector<16x32xf32>
    %153 = arith.mulf %152, %152 : vector<16x32xf32>
    %cst_41 = arith.constant dense<0.000000e+00> : vector<16xf32>
    %154 = vector.multi_reduction <add>, %153, %cst_41 [1] : vector<16x32xf32> to vector<16xf32>
    %155 = vector.shape_cast %154 : vector<16xf32> to vector<16x1xf32>
    %cst_42 = arith.constant 3.200000e+01 : f32
    %156 = vector.broadcast %cst_42 : f32 to vector<16x1xf32>
    %157 = arith.divf %155, %156 : vector<16x1xf32>
    %158 = vector.broadcast %150 : vector<16x1xf32> to vector<16x32xf32>
    %159 = arith.subf %142, %158 : vector<16x32xf32>
    %cst_43 = arith.constant 9.99999974E-6 : f32
    %160 = vector.broadcast %cst_43 : f32 to vector<16x1xf32>
    %161 = arith.addf %157, %160 : vector<16x1xf32>
    %162 = math.rsqrt %161 : vector<16x1xf32>
    %163 = vector.broadcast %162 : vector<16x1xf32> to vector<16x32xf32>
    %164 = arith.mulf %159, %163 : vector<16x32xf32>
    %165 = vector.shape_cast %144 : vector<32xf32> to vector<1x32xf32>
    %166 = vector.broadcast %165 : vector<1x32xf32> to vector<16x32xf32>
    %167 = arith.mulf %164, %166 : vector<16x32xf32>
    %168 = vector.shape_cast %146 : vector<32xf32> to vector<1x32xf32>
    %169 = vector.broadcast %168 : vector<1x32xf32> to vector<16x32xf32>
    %170 = arith.addf %167, %169 : vector<16x32xf32>
    %171 = vector.shape_cast %170 : vector<16x32xf32> to vector<2x8x32xf32>
    %c0_44 = arith.constant 0 : index
    %c0_45 = arith.constant 0 : index
    %c0_46 = arith.constant 0 : index
    %172 = vector.load %arg14[%c0_44, %c0_45, %c0_46] : memref<2x8x32xf32, #tpu.memory_space<vmem>>, vector<2x8x32xf32>
    tpu.vector_store %arg14[%c0_44, %c0_45, %c0_46], %171 {strides = array<i32>} : memref<2x8x32xf32, #tpu.memory_space<vmem>>, vector<2x8x32xf32>,
    return
  }
  func.func @transform_0(%arg0: i32) -> (i32, i32, i32) {
    %c0_i32 = arith.constant 0 : i32
    %c0_i32_0 = arith.constant 0 : i32
    %c0_i32_1 = arith.constant 0 : i32
    return %arg0, %c0_i32, %c0_i32_0 : i32, i32, i32
  }
  func.func @transform_1(%arg0: i32) -> (i32, i32) {
    %c0_i32 = arith.constant 0 : i32
    %c0_i32_0 = arith.constant 0 : i32
    %c0_i32_1 = arith.constant 0 : i32
    return %c0_i32, %c0_i32_0 : i32, i32
  }
  func.func @transform_2(%arg0: i32) -> (i32, i32) {
    %c0_i32 = arith.constant 0 : i32
    %c0_i32_0 = arith.constant 0 : i32
    %c0_i32_1 = arith.constant 0 : i32
    return %c0_i32, %c0_i32_0 : i32, i32
  }
  func.func @transform_3(%arg0: i32) -> (i32, i32) {
    %c0_i32 = arith.constant 0 : i32
    %c0_i32_0 = arith.constant 0 : i32
    %c0_i32_1 = arith.constant 0 : i32
    return %c0_i32, %c0_i32_0 : i32, i32
  }
  func.func @transform_4(%arg0: i32) -> (i32, i32) {
    %c0_i32 = arith.constant 0 : i32
    %c0_i32_0 = arith.constant 0 : i32
    %c0_i32_1 = arith.constant 0 : i32
    return %c0_i32, %c0_i32_0 : i32, i32
  }
  func.func @transform_5(%arg0: i32) -> (i32, i32) {
    %c0_i32 = arith.constant 0 : i32
    %c0_i32_0 = arith.constant 0 : i32
    %c0_i32_1 = arith.constant 0 : i32
    return %c0_i32, %c0_i32_0 : i32, i32
  }
  func.func @transform_6(%arg0: i32) -> (i32, i32) {
    %c0_i32 = arith.constant 0 : i32
    %c0_i32_0 = arith.constant 0 : i32
    %c0_i32_1 = arith.constant 0 : i32
    return %c0_i32, %c0_i32_0 : i32, i32
  }
  func.func @transform_7(%arg0: i32) -> (i32, i32) {
    %c0_i32 = arith.constant 0 : i32
    %c0_i32_0 = arith.constant 0 : i32
    %c0_i32_1 = arith.constant 0 : i32
    return %c0_i32, %c0_i32_0 : i32, i32
  }
  func.func @transform_8(%arg0: i32) -> (i32, i32) {
    %c0_i32 = arith.constant 0 : i32
    %c0_i32_0 = arith.constant 0 : i32
    %c0_i32_1 = arith.constant 0 : i32
    return %c0_i32, %c0_i32_0 : i32, i32
  }
  func.func @transform_9(%arg0: i32) -> (i32, i32) {
    %c0_i32 = arith.constant 0 : i32
    %c0_i32_0 = arith.constant 0 : i32
    %c0_i32_1 = arith.constant 0 : i32
    return %c0_i32, %c0_i32_0 : i32, i32
  }
  func.func @transform_10(%arg0: i32) -> (i32, i32) {
    %c0_i32 = arith.constant 0 : i32
    %c0_i32_0 = arith.constant 0 : i32
    %c0_i32_1 = arith.constant 0 : i32
    return %c0_i32, %c0_i32_0 : i32, i32
  }
  func.func @transform_11(%arg0: i32) -> (i32, i32) {
    %c0_i32 = arith.constant 0 : i32
    %c0_i32_0 = arith.constant 0 : i32
    %c0_i32_1 = arith.constant 0 : i32
    return %c0_i32, %c0_i32_0 : i32, i32
  }
  func.func @transform_12(%arg0: i32) -> (i32, i32) {
    %c0_i32 = arith.constant 0 : i32
    %c0_i32_0 = arith.constant 0 : i32
    %c0_i32_1 = arith.constant 0 : i32
    return %c0_i32, %c0_i32_0 : i32, i32
  }
  func.func @transform_13(%arg0: i32) -> (i32, i32, i32) {
    %c0_i32 = arith.constant 0 : i32
    %c0_i32_0 = arith.constant 0 : i32
    %c0_i32_1 = arith.constant 0 : i32
    return %arg0, %c0_i32, %c0_i32_0 : i32, i32, i32
  }
}

</mosaic_0001>

<llo_original>
// kernel: tpu_custom_call.1
$region0: #{tpu_custom_call.1}
  #allocation0 [shape = 'u32[]', space=smem, size = 0x4, offset = 0x4, fixed_abs, tag = 'smem constant byte address 0x4 - core index']
  #allocation1 [shape = 'u32[144,128]{1,0:T(1,128)}', space=vmem, size = 0x12000, scoped, tag = 'internal scratch']
  %s0 = inlined_call_operand.hbm [shape: f32[2,8,32], index: 0, kind: input, shape index: {}]
  %s1 = inlined_call_operand.vmem [shape: f32[32,96], index: 1, kind: input, shape index: {}]
  %s2 = inlined_call_operand.vmem [shape: f32[1,96], index: 2, kind: input, shape index: {}]
  %s3 = inlined_call_operand.vmem [shape: f32[32,32], index: 3, kind: input, shape index: {}]
  %s4 = inlined_call_operand.vmem [shape: f32[1,32], index: 4, kind: input, shape index: {}]
  %s5 = inlined_call_operand.vmem [shape: f32[32,64], index: 5, kind: input, shape index: {}]
  %s6 = inlined_call_operand.vmem [shape: f32[1,64], index: 6, kind: input, shape index: {}]
  %s7 = inlined_call_operand.vmem [shape: f32[64,32], index: 7, kind: input, shape index: {}]
  %s8 = inlined_call_operand.vmem [shape: f32[1,32], index: 8, kind: input, shape index: {}]
  %s9 = inlined_call_operand.vmem [shape: f32[1,32], index: 9, kind: input, shape index: {}]
  %s10 = inlined_call_operand.vmem [shape: f32[1,32], index: 10, kind: input, shape index: {}]
  %s11 = inlined_call_operand.vmem [shape: f32[1,32], index: 11, kind: input, shape index: {}]
  %s12 = inlined_call_operand.vmem [shape: f32[1,32], index: 12, kind: input, shape index: {}]
  %s13 = inlined_call_operand.hbm [shape: f32[2,8,32], index: 13, kind: output, shape index: {}]
  %s14 = sld [smem:[#allocation0]]
  $region66: #{tpu_custom_call.1} parent=0
    _
  %s16 = ssub.s32 1, %s14
  %s17 = scalar_select 0, %s16, %s14
  $region1: #{tpu_custom_call.1} parent=0
    #allocation2 [shape = 'u8[8192]{0}', space=vmem, size = 0x2000, scoped, tag = 'input window, operand 0, single buffered']
    #allocation3 [shape = 's32[1]{0}', space=sflag, size = 0x4, scoped, tag = 'scoped memory for tpu_custom_call.1']
    #allocation4 [shape = 's32[1]{0}', space=sflag, size = 0x4, scoped, tag = 'scoped memory for tpu_custom_call.1']
    #allocation5 [shape = 'u8[8192]{0}', space=vmem, size = 0x2000, scoped, tag = 'output window, operand 0, single buffered']
    %18 = vsyncpa [#allocation3], 0
    %19 = vsyncpa [#allocation4], 0
    // Predicated region
    $region2: #{tpu_custom_call.1} parent=1 // pred_check
      _
    $region3: #{tpu_custom_call.1} parent=1 // pred_check_branch
      %21 = sbr.rel (0) target = $region5
    $region4: #{tpu_custom_call.1} parent=1 // pred_region
      %s23 = ssub.s32 256, 256
      %24 = vsyncadd [#allocation3], %s23
      %s25 = sshll.u32 [#allocation2], 4
      %s26 = int_to_ptr.vmem [resolvable:$true] %s25
      %31 = dma.hbm_to_vmem [thread:$0]  %s0, 256, %s26, [#allocation3], 128, 128, 8
    $region5: #{tpu_custom_call.1} parent=1 // pred_fallthru
      _
    // Predicated region
    $region6: #{tpu_custom_call.1} parent=1 // pred_check
      _
    $region7: #{tpu_custom_call.1} parent=1 // pred_check_branch
      %33 = sbr.rel (0) target = $region9
    $region8: #{tpu_custom_call.1} parent=1 // pred_region
      _
    $region9: #{tpu_custom_call.1} parent=1 // pred_fallthru
      _
    // Predicated region
    $region10: #{tpu_custom_call.1} parent=1 // pred_check
      _
    $region11: #{tpu_custom_call.1} parent=1 // pred_check_branch
      %35 = sbr.rel (0) target = $region13
    $region12: #{tpu_custom_call.1} parent=1 // pred_region
      _
    $region13: #{tpu_custom_call.1} parent=1 // pred_fallthru
      _
    // Predicated region
    $region14: #{tpu_custom_call.1} parent=1 // pred_check
      _
    $region15: #{tpu_custom_call.1} parent=1 // pred_check_branch
      %37 = sbr.rel (0) target = $region17
    $region16: #{tpu_custom_call.1} parent=1 // pred_region
      _
    $region17: #{tpu_custom_call.1} parent=1 // pred_fallthru
      _
    // Predicated region
    $region18: #{tpu_custom_call.1} parent=1 // pred_check
      _
    $region19: #{tpu_custom_call.1} parent=1 // pred_check_branch
      %39 = sbr.rel (0) target = $region21
    $region20: #{tpu_custom_call.1} parent=1 // pred_region
      _
    $region21: #{tpu_custom_call.1} parent=1 // pred_fallthru
      _
    // Predicated region
    $region22: #{tpu_custom_call.1} parent=1 // pred_check
      _
    $region23: #{tpu_custom_call.1} parent=1 // pred_check_branch
      %41 = sbr.rel (0) target = $region25
    $region24: #{tpu_custom_call.1} parent=1 // pred_region
      _
    $region25: #{tpu_custom_call.1} parent=1 // pred_fallthru
      _
    // Predicated region
    $region26: #{tpu_custom_call.1} parent=1 // pred_check
      _
    $region27: #{tpu_custom_call.1} parent=1 // pred_check_branch
      %43 = sbr.rel (0) target = $region29
    $region28: #{tpu_custom_call.1} parent=1 // pred_region
      _
    $region29: #{tpu_custom_call.1} parent=1 // pred_fallthru
      _
    // Predicated region
    $region30: #{tpu_custom_call.1} parent=1 // pred_check
      _
    $region31: #{tpu_custom_call.1} parent=1 // pred_check_branch
      %45 = sbr.rel (0) target = $region33
    $region32: #{tpu_custom_call.1} parent=1 // pred_region
      _
    $region33: #{tpu_custom_call.1} parent=1 // pred_fallthru
      _
    // Predicated region
    $region34: #{tpu_custom_call.1} parent=1 // pred_check
      _
    $region35: #{tpu_custom_call.1} parent=1 // pred_check_branch
      %47 = sbr.rel (0) target = $region37
    $region36: #{tpu_custom_call.1} parent=1 // pred_region
      _
    $region37: #{tpu_custom_call.1} parent=1 // pred_fallthru
      _
    // Predicated region
    $region38: #{tpu_custom_call.1} parent=1 // pred_check
      _
    $region39: #{tpu_custom_call.1} parent=1 // pred_check_branch
      %49 = sbr.rel (0) target = $region41
    $region40: #{tpu_custom_call.1} parent=1 // pred_region
      _
    $region41: #{tpu_custom_call.1} parent=1 // pred_fallthru
      _
    // Predicated region
    $region42: #{tpu_custom_call.1} parent=1 // pred_check
      _
    $region43: #{tpu_custom_call.1} parent=1 // pred_check_branch
      %51 = sbr.rel (0) target = $region45
    $region44: #{tpu_custom_call.1} parent=1 // pred_region
      _
    $region45: #{tpu_custom_call.1} parent=1 // pred_fallthru
      _
    // Predicated region
    $region46: #{tpu_custom_call.1} parent=1 // pred_check
      _
    $region47: #{tpu_custom_call.1} parent=1 // pred_check_branch
      %53 = sbr.rel (0) target = $region49
    $region48: #{tpu_custom_call.1} parent=1 // pred_region
      _
    $region49: #{tpu_custom_call.1} parent=1 // pred_fallthru
      _
    // Predicated region
    $region50: #{tpu_custom_call.1} parent=1 // pred_check
      _
    $region51: #{tpu_custom_call.1} parent=1 // pred_check_branch
      %55 = sbr.rel (0) target = $region53
    $region52: #{tpu_custom_call.1} parent=1 // pred_region
      _
    $region53: #{tpu_custom_call.1} parent=1 // pred_fallthru
      _
    // Predicated region
    $region54: #{tpu_custom_call.1} parent=1 // pred_check
      _
    $region55: #{tpu_custom_call.1} parent=1 // pred_check_branch
      %57 = sbr.rel (0) target = $region57
    $region56: #{tpu_custom_call.1} parent=1 // pred_region
      %58 = dma.done [#allocation3], 256
    $region57: #{tpu_custom_call.1} parent=1 // pred_fallthru
      _
    %v59 = vld [vmem:[#allocation2] sm:$0xff]
    %v60 = vld [vmem:[#allocation2 + $0x8] sm:$0xff]
    %v61 = vld [vmem:[%s1] sm:$0xff]
    %v62 = vld [vmem:[%s1 + $0x8] sm:$0xff]
    %v63 = vld [vmem:[%s1 + $0x10] sm:$0xff]
    %v64 = vld [vmem:[%s1 + $0x18] sm:$0xff]
    %v65 = vld [vmem:[%s2] sm:$0x1]
    %v67 = vlaneseq
    %v68 = vshrl.u32 %v67, 7
    %v69 = vsub.s32 0, %v68
    %v70 = vrot.slane %v65, %v69
    %vm72 = vcmask 261120
    %v74 = vsel %vm72, %v59, 0
    %v77 = vsel %vm72, %v60, 0
    %79 = vmatprep.subr.mxu0 0.0
    %80 = vmatpush1.msra.mxu0 %v61
    %81 = vmatprep.subr.mxu0 0.0
    %82 = vmatpush1.msra.mxu0 %v62
    %83 = vmatprep.subr.mxu0 0.0
    %84 = vmatpush1.msra.mxu0 %v63
    %85 = vmatprep.subr.mxu0 0.0
    %86 = vmatpush1.msra.mxu0 %v64
    %87 = vmatprep.subr.mxu0 0.0
    %88 = vmatpush1.msra.mxu0 0.0
    %89 = vmatprep.subr.mxu0 0.0
    %90 = vmatpush1.msra.mxu0 0.0
    %91 = vmatprep.subr.mxu0 0.0
    %92 = vmatpush1.msra.mxu0 0.0
    %93 = vmatprep.subr.mxu0 0.0
    %94 = vmatpush1.msra.mxu0 0.0
    %95 = vmatprep.subr.mxu0 0.0
    %96 = vmatpush1.msra.mxu0 0.0
    %97 = vmatprep.subr.mxu0 0.0
    %98 = vmatpush1.msra.mxu0 0.0
    %99 = vmatprep.subr.mxu0 0.0
    %100 = vmatpush1.msra.mxu0 0.0
    %101 = vmatprep.subr.mxu0 0.0
    %102 = vmatpush1.msra.mxu0 0.0
    %103 = vmatprep.subr.mxu0 0.0
    %104 = vmatpush1.msra.mxu0 0.0
    %105 = vmatprep.subr.mxu0 0.0
    %106 = vmatpush1.msra.mxu0 0.0
    %107 = vmatprep.subr.mxu0 0.0
    %108 = vmatpush1.msra.mxu0 0.0
    %109 = vmatprep.subr.mxu0 0.0
    %110 = vmatpush1.msra.mxu0 0.0
    %111 = vmatprep.subr.mxu0 0.0
    %112 = vmatpush1.msra.mxu0 0.0
    %113 = vmatprep.subr.mxu0 0.0
    %114 = vmatpush1.msra.mxu0 0.0
    %115 = vmatprep.subr.mxu0 0.0
    %116 = vmatpush1.msra.mxu0 0.0
    %117 = vmatprep.subr.mxu0 0.0
    %118 = vmatpush1.msra.mxu0 0.0
    %119 = vmatprep.subr.mxu0 0.0
    %120 = vmatpush1.msra.mxu0 0.0
    %121 = vmatprep.subr.mxu0 0.0
    %122 = vmatpush1.msra.mxu0 0.0
    %123 = vmatprep.subr.mxu0 0.0
    %124 = vmatpush1.msra.mxu0 0.0
    %125 = vmatprep.subr.mxu0 0.0
    %126 = vmatpush1.msra.mxu0 0.0
    %127 = vmatprep.subr.mxu0 0.0
    %128 = vmatpush1.msra.mxu0 0.0
    %129 = vmatprep.subr.mxu0 0.0
    %130 = vmatpush1.msra.mxu0 0.0
    %131 = vmatprep.subr.mxu0 0.0
    %132 = vmatpush1.msra.mxu0 0.0
    %133 = vmatprep.subr.mxu0 0.0
    %134 = vmatpush1.msra.mxu0 0.0
    %135 = vmatprep.subr.mxu0 0.0
    %136 = vmatpush1.msra.mxu0 0.0
    %137 = vmatprep.subr.mxu0 0.0
    %138 = vmatpush1.msra.mxu0 0.0
    %139 = vmatprep.subr.mxu0 0.0
    %140 = vmatpush1.msra.mxu0 0.0
    %141 = vmatprep.subr.mxu0 0.0
    %142 = vmatpush1.msra.mxu0 0.0
    %143 = vmatprep.mubr.f32.mxu0 0.0
    %144 = vmatmul.mubr.f32.gmra.mrb[0].mxu0 %v74
    %v145 = vpop.f32.mrb[0].mxu0
    %v146 = vadd.f32 %v70, %v145
    %v147 = vpop.f32.mrb[0].mxu0
    %148 = vmatprep.mubr.f32.mxu0 0.0
    %149 = vmatmul.mubr.f32.gmra.mrb[0].mxu0 %v77
    %v150 = vpop.f32.mrb[0].mxu0
    %v151 = vadd.f32 %v70, %v150
    %v152 = vpop.f32.mrb[0].mxu0
    %153 = vdwg.mxu0
    %155 = vrot.lane.b32.xlu0 %v146, 120
    %v156 = vpop.permute.xlu0 %155
    %157 = vrot.lane.b32.xlu0 %v146, 112
    %v158 = vpop.permute.xlu0 %157
    %159 = vrot.lane.b32.xlu0 %v146, 104
    %v160 = vpop.permute.xlu0 %159
    %162 = vrot.lane.b32.xlu0 %v151, 120
    %v163 = vpop.permute.xlu0 %162
    %164 = vrot.lane.b32.xlu0 %v151, 112
    %v165 = vpop.permute.xlu0 %164
    %166 = vrot.lane.b32.xlu0 %v151, 104
    %v167 = vpop.permute.xlu0 %166
    %168 = vrot.lane.b32.xlu0 %v146, 96
    %v169 = vpop.permute.xlu0 %168
    %vm170 = vcmask 64512
    %v171 = vsel %vm170, %v146, 0
    %v173 = vsel %vm170, %v169, 0
    %175 = vmatprep.subr.mxu0 0.0
    %176 = vmatpush1.xpose.msra.mxu0 %v173
    %177 = vmatprep.subr.mxu0 0.0
    %178 = vmatpush1.xpose.msra.mxu0 0.0
    %179 = vmatprep.subr.mxu0 0.0
    %180 = vmatpush1.xpose.msra.mxu0 0.0
    %181 = vmatprep.subr.mxu0 0.0
    %182 = vmatpush1.xpose.msra.mxu0 0.0
    %183 = vmatprep.subr.mxu0 0.0
    %184 = vmatpush1.xpose.msra.mxu0 0.0
    %185 = vmatprep.subr.mxu0 0.0
    %186 = vmatpush1.xpose.msra.mxu0 0.0
    %187 = vmatprep.subr.mxu0 0.0
    %188 = vmatpush1.xpose.msra.mxu0 0.0
    %189 = vmatprep.subr.mxu0 0.0
    %190 = vmatpush1.xpose.msra.mxu0 0.0
    %191 = vmatprep.subr.mxu0 0.0
    %192 = vmatpush1.xpose.msra.mxu0 0.0
    %193 = vmatprep.subr.mxu0 0.0
    %194 = vmatpush1.xpose.msra.mxu0 0.0
    %195 = vmatprep.subr.mxu0 0.0
    %196 = vmatpush1.xpose.msra.mxu0 0.0
    %197 = vmatprep.subr.mxu0 0.0
    %198 = vmatpush1.xpose.msra.mxu0 0.0
    %199 = vmatprep.subr.mxu0 0.0
    %200 = vmatpush1.xpose.msra.mxu0 0.0
    %201 = vmatprep.subr.mxu0 0.0
    %202 = vmatpush1.xpose.msra.mxu0 0.0
    %203 = vmatprep.subr.mxu0 0.0
    %204 = vmatpush1.xpose.msra.mxu0 0.0
    %205 = vmatprep.subr.mxu0 0.0
    %206 = vmatpush1.xpose.msra.mxu0 0.0
    %207 = vmatprep.subr.mxu0 0.0
    %208 = vmatpush1.xpose.msra.mxu0 0.0
    %209 = vmatprep.subr.mxu0 0.0
    %210 = vmatpush1.xpose.msra.mxu0 0.0
    %211 = vmatprep.subr.mxu0 0.0
    %212 = vmatpush1.xpose.msra.mxu0 0.0
    %213 = vmatprep.subr.mxu0 0.0
    %214 = vmatpush1.xpose.msra.mxu0 0.0
    %215 = vmatprep.subr.mxu0 0.0
    %216 = vmatpush1.xpose.msra.mxu0 0.0
    %217 = vmatprep.subr.mxu0 0.0
    %218 = vmatpush1.xpose.msra.mxu0 0.0
    %219 = vmatprep.subr.mxu0 0.0
    %220 = vmatpush1.xpose.msra.mxu0 0.0
    %221 = vmatprep.subr.mxu0 0.0
    %222 = vmatpush1.xpose.msra.mxu0 0.0
    %223 = vmatprep.subr.mxu0 0.0
    %224 = vmatpush1.xpose.msra.mxu0 0.0
    %225 = vmatprep.subr.mxu0 0.0
    %226 = vmatpush1.xpose.msra.mxu0 0.0
    %227 = vmatprep.subr.mxu0 0.0
    %228 = vmatpush1.xpose.msra.mxu0 0.0
    %229 = vmatprep.subr.mxu0 0.0
    %230 = vmatpush1.xpose.msra.mxu0 0.0
    %231 = vmatprep.subr.mxu0 0.0
    %232 = vmatpush1.xpose.msra.mxu0 0.0
    %233 = vmatprep.subr.mxu0 0.0
    %234 = vmatpush1.xpose.msra.mxu0 0.0
    %235 = vmatprep.subr.mxu0 0.0
    %236 = vmatpush1.xpose.msra.mxu0 0.0
    %237 = vmatprep.subr.mxu0 0.0
    %238 = vmatpush1.xpose.msra.mxu0 0.0
    %239 = vmatprep.mubr.f32.mxu0 0.0
    %240 = vmatmul.mubr.f32.gmra.mrb[0].mxu0 %v171
    %v241 = vpop.f32.mrb[0].mxu0
    %v242 = vadd.f32 0.0, %v241
    %v243 = vpop.f32.mrb[0].mxu0
    %244 = vdwg.mxu0
    %245 = vrot.lane.b32.xlu0 %v156, 96
    %v246 = vpop.permute.xlu0 %245
    %v247 = vsel %vm170, %v156, 0
    %v249 = vsel %vm170, %v246, 0
    %251 = vmatprep.subr.mxu0 0.0
    %252 = vmatpush1.xpose.msra.mxu0 %v249
    %253 = vmatprep.subr.mxu0 0.0
    %254 = vmatpush1.xpose.msra.mxu0 0.0
    %255 = vmatprep.subr.mxu0 0.0
    %256 = vmatpush1.xpose.msra.mxu0 0.0
    %257 = vmatprep.subr.mxu0 0.0
    %258 = vmatpush1.xpose.msra.mxu0 0.0
    %259 = vmatprep.subr.mxu0 0.0
    %260 = vmatpush1.xpose.msra.mxu0 0.0
    %261 = vmatprep.subr.mxu0 0.0
    %262 = vmatpush1.xpose.msra.mxu0 0.0
    %263 = vmatprep.subr.mxu0 0.0
    %264 = vmatpush1.xpose.msra.mxu0 0.0
    %265 = vmatprep.subr.mxu0 0.0
    %266 = vmatpush1.xpose.msra.mxu0 0.0
    %267 = vmatprep.subr.mxu0 0.0
    %268 = vmatpush1.xpose.msra.mxu0 0.0
    %269 = vmatprep.subr.mxu0 0.0
    %270 = vmatpush1.xpose.msra.mxu0 0.0
    %271 = vmatprep.subr.mxu0 0.0
    %272 = vmatpush1.xpose.msra.mxu0 0.0
    %273 = vmatprep.subr.mxu0 0.0
    %274 = vmatpush1.xpose.msra.mxu0 0.0
    %275 = vmatprep.subr.mxu0 0.0
    %276 = vmatpush1.xpose.msra.mxu0 0.0
    %277 = vmatprep.subr.mxu0 0.0
    %278 = vmatpush1.xpose.msra.mxu0 0.0
    %279 = vmatprep.subr.mxu0 0.0
    %280 = vmatpush1.xpose.msra.mxu0 0.0
    %281 = vmatprep.subr.mxu0 0.0
    %282 = vmatpush1.xpose.msra.mxu0 0.0
    %283 = vmatprep.subr.mxu0 0.0
    %284 = vmatpush1.xpose.msra.mxu0 0.0
    %285 = vmatprep.subr.mxu0 0.0
    %286 = vmatpush1.xpose.msra.mxu0 0.0
    %287 = vmatprep.subr.mxu0 0.0
    %288 = vmatpush1.xpose.msra.mxu0 0.0
    %289 = vmatprep.subr.mxu0 0.0
    %290 = vmatpush1.xpose.msra.mxu0 0.0
    %291 = vmatprep.subr.mxu0 0.0
    %292 = vmatpush1.xpose.msra.mxu0 0.0
    %293 = vmatprep.subr.mxu0 0.0
    %294 = vmatpush1.xpose.msra.mxu0 0.0
    %295 = vmatprep.subr.mxu0 0.0
    %296 = vmatpush1.xpose.msra.mxu0 0.0
    %297 = vmatprep.subr.mxu0 0.0
    %298 = vmatpush1.xpose.msra.mxu0 0.0
    %299 = vmatprep.subr.mxu0 0.0
    %300 = vmatpush1.xpose.msra.mxu0 0.0
    %301 = vmatprep.subr.mxu0 0.0
    %302 = vmatpush1.xpose.msra.mxu0 0.0
    %303 = vmatprep.subr.mxu0 0.0
    %304 = vmatpush1.xpose.msra.mxu0 0.0
    %305 = vmatprep.subr.mxu0 0.0
    %306 = vmatpush1.xpose.msra.mxu0 0.0
    %307 = vmatprep.subr.mxu0 0.0
    %308 = vmatpush1.xpose.msra.mxu0 0.0
    %309 = vmatprep.subr.mxu0 0.0
    %310 = vmatpush1.xpose.msra.mxu0 0.0
    %311 = vmatprep.subr.mxu0 0.0
    %312 = vmatpush1.xpose.msra.mxu0 0.0
    %313 = vmatprep.subr.mxu0 0.0
    %314 = vmatpush1.xpose.msra.mxu0 0.0
    %315 = vmatprep.mubr.f32.mxu0 0.0
    %316 = vmatmul.mubr.f32.gmra.mrb[0].mxu0 %v247
    %v317 = vpop.f32.mrb[0].mxu0
    %v318 = vadd.f32 0.0, %v317
    %v319 = vpop.f32.mrb[0].mxu0
    %320 = vdwg.mxu0
    %321 = vrot.lane.b32.xlu0 %v158, 96
    %v322 = vpop.permute.xlu0 %321
    %v323 = vsel %vm170, %v158, 0
    %v325 = vsel %vm170, %v322, 0
    %327 = vmatprep.subr.mxu0 0.0
    %328 = vmatpush1.xpose.msra.mxu0 %v325
    %329 = vmatprep.subr.mxu0 0.0
    %330 = vmatpush1.xpose.msra.mxu0 0.0
    %331 = vmatprep.subr.mxu0 0.0
    %332 = vmatpush1.xpose.msra.mxu0 0.0
    %333 = vmatprep.subr.mxu0 0.0
    %334 = vmatpush1.xpose.msra.mxu0 0.0
    %335 = vmatprep.subr.mxu0 0.0
    %336 = vmatpush1.xpose.msra.mxu0 0.0
    %337 = vmatprep.subr.mxu0 0.0
    %338 = vmatpush1.xpose.msra.mxu0 0.0
    %339 = vmatprep.subr.mxu0 0.0
    %340 = vmatpush1.xpose.msra.mxu0 0.0
    %341 = vmatprep.subr.mxu0 0.0
    %342 = vmatpush1.xpose.msra.mxu0 0.0
    %343 = vmatprep.subr.mxu0 0.0
    %344 = vmatpush1.xpose.msra.mxu0 0.0
    %345 = vmatprep.subr.mxu0 0.0
    %346 = vmatpush1.xpose.msra.mxu0 0.0
    %347 = vmatprep.subr.mxu0 0.0
    %348 = vmatpush1.xpose.msra.mxu0 0.0
    %349 = vmatprep.subr.mxu0 0.0
    %350 = vmatpush1.xpose.msra.mxu0 0.0
    %351 = vmatprep.subr.mxu0 0.0
    %352 = vmatpush1.xpose.msra.mxu0 0.0
    %353 = vmatprep.subr.mxu0 0.0
    %354 = vmatpush1.xpose.msra.mxu0 0.0
    %355 = vmatprep.subr.mxu0 0.0
    %356 = vmatpush1.xpose.msra.mxu0 0.0
    %357 = vmatprep.subr.mxu0 0.0
    %358 = vmatpush1.xpose.msra.mxu0 0.0
    %359 = vmatprep.subr.mxu0 0.0
    %360 = vmatpush1.xpose.msra.mxu0 0.0
    %361 = vmatprep.subr.mxu0 0.0
    %362 = vmatpush1.xpose.msra.mxu0 0.0
    %363 = vmatprep.subr.mxu0 0.0
    %364 = vmatpush1.xpose.msra.mxu0 0.0
    %365 = vmatprep.subr.mxu0 0.0
    %366 = vmatpush1.xpose.msra.mxu0 0.0
    %367 = vmatprep.subr.mxu0 0.0
    %368 = vmatpush1.xpose.msra.mxu0 0.0
    %369 = vmatprep.subr.mxu0 0.0
    %370 = vmatpush1.xpose.msra.mxu0 0.0
    %371 = vmatprep.subr.mxu0 0.0
    %372 = vmatpush1.xpose.msra.mxu0 0.0
    %373 = vmatprep.subr.mxu0 0.0
    %374 = vmatpush1.xpose.msra.mxu0 0.0
    %375 = vmatprep.subr.mxu0 0.0
    %376 = vmatpush1.xpose.msra.mxu0 0.0
    %377 = vmatprep.subr.mxu0 0.0
    %378 = vmatpush1.xpose.msra.mxu0 0.0
    %379 = vmatprep.subr.mxu0 0.0
    %380 = vmatpush1.xpose.msra.mxu0 0.0
    %381 = vmatprep.subr.mxu0 0.0
    %382 = vmatpush1.xpose.msra.mxu0 0.0
    %383 = vmatprep.subr.mxu0 0.0
    %384 = vmatpush1.xpose.msra.mxu0 0.0
    %385 = vmatprep.subr.mxu0 0.0
    %386 = vmatpush1.xpose.msra.mxu0 0.0
    %387 = vmatprep.subr.mxu0 0.0
    %388 = vmatpush1.xpose.msra.mxu0 0.0
    %389 = vmatprep.subr.mxu0 0.0
    %390 = vmatpush1.xpose.msra.mxu0 0.0
    %391 = vmatprep.mubr.f32.mxu0 0.0
    %392 = vmatmul.mubr.f32.gmra.mrb[0].mxu0 %v323
    %v393 = vpop.f32.mrb[0].mxu0
    %v394 = vadd.f32 0.0, %v393
    %v395 = vpop.f32.mrb[0].mxu0
    %396 = vdwg.mxu0
    %397 = vrot.lane.b32.xlu0 %v160, 96
    %v398 = vpop.permute.xlu0 %397
    %v399 = vsel %vm170, %v160, 0
    %v401 = vsel %vm170, %v398, 0
    %403 = vmatprep.subr.mxu0 0.0
    %404 = vmatpush1.xpose.msra.mxu0 %v401
    %405 = vmatprep.subr.mxu0 0.0
    %406 = vmatpush1.xpose.msra.mxu0 0.0
    %407 = vmatprep.subr.mxu0 0.0
    %408 = vmatpush1.xpose.msra.mxu0 0.0
    %409 = vmatprep.subr.mxu0 0.0
    %410 = vmatpush1.xpose.msra.mxu0 0.0
    %411 = vmatprep.subr.mxu0 0.0
    %412 = vmatpush1.xpose.msra.mxu0 0.0
    %413 = vmatprep.subr.mxu0 0.0
    %414 = vmatpush1.xpose.msra.mxu0 0.0
    %415 = vmatprep.subr.mxu0 0.0
    %416 = vmatpush1.xpose.msra.mxu0 0.0
    %417 = vmatprep.subr.mxu0 0.0
    %418 = vmatpush1.xpose.msra.mxu0 0.0
    %419 = vmatprep.subr.mxu0 0.0
    %420 = vmatpush1.xpose.msra.mxu0 0.0
    %421 = vmatprep.subr.mxu0 0.0
    %422 = vmatpush1.xpose.msra.mxu0 0.0
    %423 = vmatprep.subr.mxu0 0.0
    %424 = vmatpush1.xpose.msra.mxu0 0.0
    %425 = vmatprep.subr.mxu0 0.0
    %426 = vmatpush1.xpose.msra.mxu0 0.0
    %427 = vmatprep.subr.mxu0 0.0
    %428 = vmatpush1.xpose.msra.mxu0 0.0
    %429 = vmatprep.subr.mxu0 0.0
    %430 = vmatpush1.xpose.msra.mxu0 0.0
    %431 = vmatprep.subr.mxu0 0.0
    %432 = vmatpush1.xpose.msra.mxu0 0.0
    %433 = vmatprep.subr.mxu0 0.0
    %434 = vmatpush1.xpose.msra.mxu0 0.0
    %435 = vmatprep.subr.mxu0 0.0
    %436 = vmatpush1.xpose.msra.mxu0 0.0
    %437 = vmatprep.subr.mxu0 0.0
    %438 = vmatpush1.xpose.msra.mxu0 0.0
    %439 = vmatprep.subr.mxu0 0.0
    %440 = vmatpush1.xpose.msra.mxu0 0.0
    %441 = vmatprep.subr.mxu0 0.0
    %442 = vmatpush1.xpose.msra.mxu0 0.0
    %443 = vmatprep.subr.mxu0 0.0
    %444 = vmatpush1.xpose.msra.mxu0 0.0
    %445 = vmatprep.subr.mxu0 0.0
    %446 = vmatpush1.xpose.msra.mxu0 0.0
    %447 = vmatprep.subr.mxu0 0.0
    %448 = vmatpush1.xpose.msra.mxu0 0.0
    %449 = vmatprep.subr.mxu0 0.0
    %450 = vmatpush1.xpose.msra.mxu0 0.0
    %451 = vmatprep.subr.mxu0 0.0
    %452 = vmatpush1.xpose.msra.mxu0 0.0
    %453 = vmatprep.subr.mxu0 0.0
    %454 = vmatpush1.xpose.msra.mxu0 0.0
    %455 = vmatprep.subr.mxu0 0.0
    %456 = vmatpush1.xpose.msra.mxu0 0.0
    %457 = vmatprep.subr.mxu0 0.0
    %458 = vmatpush1.xpose.msra.mxu0 0.0
    %459 = vmatprep.subr.mxu0 0.0
    %460 = vmatpush1.xpose.msra.mxu0 0.0
    %461 = vmatprep.subr.mxu0 0.0
    %462 = vmatpush1.xpose.msra.mxu0 0.0
    %463 = vmatprep.subr.mxu0 0.0
    %464 = vmatpush1.xpose.msra.mxu0 0.0
    %465 = vmatprep.subr.mxu0 0.0
    %466 = vmatpush1.xpose.msra.mxu0 0.0
    %467 = vmatprep.mubr.f32.mxu0 0.0
    %468 = vmatmul.mubr.f32.gmra.mrb[0].mxu0 %v399
    %v469 = vpop.f32.mrb[0].mxu0
    %v470 = vadd.f32 0.0, %v469
    %v471 = vpop.f32.mrb[0].mxu0
    %472 = vdwg.mxu0
    %473 = vrot.lane.b32.xlu0 %v151, 96
    %v474 = vpop.permute.xlu0 %473
    %v475 = vsel %vm170, %v151, 0
    %v477 = vsel %vm170, %v474, 0
    %479 = vmatprep.subr.mxu0 0.0
    %480 = vmatpush1.xpose.msra.mxu0 %v477
    %481 = vmatprep.subr.mxu0 0.0
    %482 = vmatpush1.xpose.msra.mxu0 0.0
    %483 = vmatprep.subr.mxu0 0.0
    %484 = vmatpush1.xpose.msra.mxu0 0.0
    %485 = vmatprep.subr.mxu0 0.0
    %486 = vmatpush1.xpose.msra.mxu0 0.0
    %487 = vmatprep.subr.mxu0 0.0
    %488 = vmatpush1.xpose.msra.mxu0 0.0
    %489 = vmatprep.subr.mxu0 0.0
    %490 = vmatpush1.xpose.msra.mxu0 0.0
    %491 = vmatprep.subr.mxu0 0.0
    %492 = vmatpush1.xpose.msra.mxu0 0.0
    %493 = vmatprep.subr.mxu0 0.0
    %494 = vmatpush1.xpose.msra.mxu0 0.0
    %495 = vmatprep.subr.mxu0 0.0
    %496 = vmatpush1.xpose.msra.mxu0 0.0
    %497 = vmatprep.subr.mxu0 0.0
    %498 = vmatpush1.xpose.msra.mxu0 0.0
    %499 = vmatprep.subr.mxu0 0.0
    %500 = vmatpush1.xpose.msra.mxu0 0.0
    %501 = vmatprep.subr.mxu0 0.0
    %502 = vmatpush1.xpose.msra.mxu0 0.0
    %503 = vmatprep.subr.mxu0 0.0
    %504 = vmatpush1.xpose.msra.mxu0 0.0
    %505 = vmatprep.subr.mxu0 0.0
    %506 = vmatpush1.xpose.msra.mxu0 0.0
    %507 = vmatprep.subr.mxu0 0.0
    %508 = vmatpush1.xpose.msra.mxu0 0.0
    %509 = vmatprep.subr.mxu0 0.0
    %510 = vmatpush1.xpose.msra.mxu0 0.0
    %511 = vmatprep.subr.mxu0 0.0
    %512 = vmatpush1.xpose.msra.mxu0 0.0
    %513 = vmatprep.subr.mxu0 0.0
    %514 = vmatpush1.xpose.msra.mxu0 0.0
    %515 = vmatprep.subr.mxu0 0.0
    %516 = vmatpush1.xpose.msra.mxu0 0.0
    %517 = vmatprep.subr.mxu0 0.0
    %518 = vmatpush1.xpose.msra.mxu0 0.0
    %519 = vmatprep.subr.mxu0 0.0
    %520 = vmatpush1.xpose.msra.mxu0 0.0
    %521 = vmatprep.subr.mxu0 0.0
    %522 = vmatpush1.xpose.msra.mxu0 0.0
    %523 = vmatprep.subr.mxu0 0.0
    %524 = vmatpush1.xpose.msra.mxu0 0.0
    %525 = vmatprep.subr.mxu0 0.0
    %526 = vmatpush1.xpose.msra.mxu0 0.0
    %527 = vmatprep.subr.mxu0 0.0
    %528 = vmatpush1.xpose.msra.mxu0 0.0
    %529 = vmatprep.subr.mxu0 0.0
    %530 = vmatpush1.xpose.msra.mxu0 0.0
    %531 = vmatprep.subr.mxu0 0.0
    %532 = vmatpush1.xpose.msra.mxu0 0.0
    %533 = vmatprep.subr.mxu0 0.0
    %534 = vmatpush1.xpose.msra.mxu0 0.0
    %535 = vmatprep.subr.mxu0 0.0
    %536 = vmatpush1.xpose.msra.mxu0 0.0
    %537 = vmatprep.subr.mxu0 0.0
    %538 = vmatpush1.xpose.msra.mxu0 0.0
    %539 = vmatprep.subr.mxu0 0.0
    %540 = vmatpush1.xpose.msra.mxu0 0.0
    %541 = vmatprep.subr.mxu0 0.0
    %542 = vmatpush1.xpose.msra.mxu0 0.0
    %543 = vmatprep.mubr.f32.mxu0 0.0
    %544 = vmatmul.mubr.f32.gmra.mrb[0].mxu0 %v475
    %v545 = vpop.f32.mrb[0].mxu0
    %v546 = vadd.f32 0.0, %v545
    %v547 = vpop.f32.mrb[0].mxu0
    %548 = vdwg.mxu0
    %549 = vrot.lane.b32.xlu0 %v163, 96
    %v550 = vpop.permute.xlu0 %549
    %v551 = vsel %vm170, %v163, 0
    %v553 = vsel %vm170, %v550, 0
    %555 = vmatprep.subr.mxu0 0.0
    %556 = vmatpush1.xpose.msra.mxu0 %v553
    %557 = vmatprep.subr.mxu0 0.0
    %558 = vmatpush1.xpose.msra.mxu0 0.0
    %559 = vmatprep.subr.mxu0 0.0
    %560 = vmatpush1.xpose.msra.mxu0 0.0
    %561 = vmatprep.subr.mxu0 0.0
    %562 = vmatpush1.xpose.msra.mxu0 0.0
    %563 = vmatprep.subr.mxu0 0.0
    %564 = vmatpush1.xpose.msra.mxu0 0.0
    %565 = vmatprep.subr.mxu0 0.0
    %566 = vmatpush1.xpose.msra.mxu0 0.0
    %567 = vmatprep.subr.mxu0 0.0
    %568 = vmatpush1.xpose.msra.mxu0 0.0
    %569 = vmatprep.subr.mxu0 0.0
    %570 = vmatpush1.xpose.msra.mxu0 0.0
    %571 = vmatprep.subr.mxu0 0.0
    %572 = vmatpush1.xpose.msra.mxu0 0.0
    %573 = vmatprep.subr.mxu0 0.0
    %574 = vmatpush1.xpose.msra.mxu0 0.0
    %575 = vmatprep.subr.mxu0 0.0
    %576 = vmatpush1.xpose.msra.mxu0 0.0
    %577 = vmatprep.subr.mxu0 0.0
    %578 = vmatpush1.xpose.msra.mxu0 0.0
    %579 = vmatprep.subr.mxu0 0.0
    %580 = vmatpush1.xpose.msra.mxu0 0.0
    %581 = vmatprep.subr.mxu0 0.0
    %582 = vmatpush1.xpose.msra.mxu0 0.0
    %583 = vmatprep.subr.mxu0 0.0
    %584 = vmatpush1.xpose.msra.mxu0 0.0
    %585 = vmatprep.subr.mxu0 0.0
    %586 = vmatpush1.xpose.msra.mxu0 0.0
    %587 = vmatprep.subr.mxu0 0.0
    %588 = vmatpush1.xpose.msra.mxu0 0.0
    %589 = vmatprep.subr.mxu0 0.0
    %590 = vmatpush1.xpose.msra.mxu0 0.0
    %591 = vmatprep.subr.mxu0 0.0
    %592 = vmatpush1.xpose.msra.mxu0 0.0
    %593 = vmatprep.subr.mxu0 0.0
    %594 = vmatpush1.xpose.msra.mxu0 0.0
    %595 = vmatprep.subr.mxu0 0.0
    %596 = vmatpush1.xpose.msra.mxu0 0.0
    %597 = vmatprep.subr.mxu0 0.0
    %598 = vmatpush1.xpose.msra.mxu0 0.0
    %599 = vmatprep.subr.mxu0 0.0
    %600 = vmatpush1.xpose.msra.mxu0 0.0
    %601 = vmatprep.subr.mxu0 0.0
    %602 = vmatpush1.xpose.msra.mxu0 0.0
    %603 = vmatprep.subr.mxu0 0.0
    %604 = vmatpush1.xpose.msra.mxu0 0.0
    %605 = vmatprep.subr.mxu0 0.0
    %606 = vmatpush1.xpose.msra.mxu0 0.0
    %607 = vmatprep.subr.mxu0 0.0
    %608 = vmatpush1.xpose.msra.mxu0 0.0
    %609 = vmatprep.subr.mxu0 0.0
    %610 = vmatpush1.xpose.msra.mxu0 0.0
    %611 = vmatprep.subr.mxu0 0.0
    %612 = vmatpush1.xpose.msra.mxu0 0.0
    %613 = vmatprep.subr.mxu0 0.0
    %614 = vmatpush1.xpose.msra.mxu0 0.0
    %615 = vmatprep.subr.mxu0 0.0
    %616 = vmatpush1.xpose.msra.mxu0 0.0
    %617 = vmatprep.subr.mxu0 0.0
    %618 = vmatpush1.xpose.msra.mxu0 0.0
    %619 = vmatprep.mubr.f32.mxu0 0.0
    %620 = vmatmul.mubr.f32.gmra.mrb[0].mxu0 %v551
    %v621 = vpop.f32.mrb[0].mxu0
    %v622 = vadd.f32 0.0, %v621
    %v623 = vpop.f32.mrb[0].mxu0
    %624 = vdwg.mxu0
    %625 = vrot.lane.b32.xlu0 %v165, 96
    %v626 = vpop.permute.xlu0 %625
    %v627 = vsel %vm170, %v165, 0
    %v629 = vsel %vm170, %v626, 0
    %631 = vmatprep.subr.mxu0 0.0
    %632 = vmatpush1.xpose.msra.mxu0 %v629
    %633 = vmatprep.subr.mxu0 0.0
    %634 = vmatpush1.xpose.msra.mxu0 0.0
    %635 = vmatprep.subr.mxu0 0.0
    %636 = vmatpush1.xpose.msra.mxu0 0.0
    %637 = vmatprep.subr.mxu0 0.0
    %638 = vmatpush1.xpose.msra.mxu0 0.0
    %639 = vmatprep.subr.mxu0 0.0
    %640 = vmatpush1.xpose.msra.mxu0 0.0
    %641 = vmatprep.subr.mxu0 0.0
    %642 = vmatpush1.xpose.msra.mxu0 0.0
    %643 = vmatprep.subr.mxu0 0.0
    %644 = vmatpush1.xpose.msra.mxu0 0.0
    %645 = vmatprep.subr.mxu0 0.0
    %646 = vmatpush1.xpose.msra.mxu0 0.0
    %647 = vmatprep.subr.mxu0 0.0
    %648 = vmatpush1.xpose.msra.mxu0 0.0
    %649 = vmatprep.subr.mxu0 0.0
    %650 = vmatpush1.xpose.msra.mxu0 0.0
    %651 = vmatprep.subr.mxu0 0.0
    %652 = vmatpush1.xpose.msra.mxu0 0.0
    %653 = vmatprep.subr.mxu0 0.0
    %654 = vmatpush1.xpose.msra.mxu0 0.0
    %655 = vmatprep.subr.mxu0 0.0
    %656 = vmatpush1.xpose.msra.mxu0 0.0
    %657 = vmatprep.subr.mxu0 0.0
    %658 = vmatpush1.xpose.msra.mxu0 0.0
    %659 = vmatprep.subr.mxu0 0.0
    %660 = vmatpush1.xpose.msra.mxu0 0.0
    %661 = vmatprep.subr.mxu0 0.0
    %662 = vmatpush1.xpose.msra.mxu0 0.0
    %663 = vmatprep.subr.mxu0 0.0
    %664 = vmatpush1.xpose.msra.mxu0 0.0
    %665 = vmatprep.subr.mxu0 0.0
    %666 = vmatpush1.xpose.msra.mxu0 0.0
    %667 = vmatprep.subr.mxu0 0.0
    %668 = vmatpush1.xpose.msra.mxu0 0.0
    %669 = vmatprep.subr.mxu0 0.0
    %670 = vmatpush1.xpose.msra.mxu0 0.0
    %671 = vmatprep.subr.mxu0 0.0
    %672 = vmatpush1.xpose.msra.mxu0 0.0
    %673 = vmatprep.subr.mxu0 0.0
    %674 = vmatpush1.xpose.msra.mxu0 0.0
    %675 = vmatprep.subr.mxu0 0.0
    %676 = vmatpush1.xpose.msra.mxu0 0.0
    %677 = vmatprep.subr.mxu0 0.0
    %678 = vmatpush1.xpose.msra.mxu0 0.0
    %679 = vmatprep.subr.mxu0 0.0
    %680 = vmatpush1.xpose.msra.mxu0 0.0
    %681 = vmatprep.subr.mxu0 0.0
    %682 = vmatpush1.xpose.msra.mxu0 0.0
    %683 = vmatprep.subr.mxu0 0.0
    %684 = vmatpush1.xpose.msra.mxu0 0.0
    %685 = vmatprep.subr.mxu0 0.0
    %686 = vmatpush1.xpose.msra.mxu0 0.0
    %687 = vmatprep.subr.mxu0 0.0
    %688 = vmatpush1.xpose.msra.mxu0 0.0
    %689 = vmatprep.subr.mxu0 0.0
    %690 = vmatpush1.xpose.msra.mxu0 0.0
    %691 = vmatprep.subr.mxu0 0.0
    %692 = vmatpush1.xpose.msra.mxu0 0.0
    %693 = vmatprep.subr.mxu0 0.0
    %694 = vmatpush1.xpose.msra.mxu0 0.0
    %695 = vmatprep.mubr.f32.mxu0 0.0
    %696 = vmatmul.mubr.f32.gmra.mrb[0].mxu0 %v627
    %v697 = vpop.f32.mrb[0].mxu0
    %v698 = vadd.f32 0.0, %v697
    %v699 = vpop.f32.mrb[0].mxu0
    %700 = vdwg.mxu0
    %701 = vrot.lane.b32.xlu0 %v167, 96
    %v702 = vpop.permute.xlu0 %701
    %v703 = vsel %vm170, %v167, 0
    %v705 = vsel %vm170, %v702, 0
    %707 = vmatprep.subr.mxu0 0.0
    %708 = vmatpush1.xpose.msra.mxu0 %v705
    %709 = vmatprep.subr.mxu0 0.0
    %710 = vmatpush1.xpose.msra.mxu0 0.0
    %711 = vmatprep.subr.mxu0 0.0
    %712 = vmatpush1.xpose.msra.mxu0 0.0
    %713 = vmatprep.subr.mxu0 0.0
    %714 = vmatpush1.xpose.msra.mxu0 0.0
    %715 = vmatprep.subr.mxu0 0.0
    %716 = vmatpush1.xpose.msra.mxu0 0.0
    %717 = vmatprep.subr.mxu0 0.0
    %718 = vmatpush1.xpose.msra.mxu0 0.0
    %719 = vmatprep.subr.mxu0 0.0
    %720 = vmatpush1.xpose.msra.mxu0 0.0
    %721 = vmatprep.subr.mxu0 0.0
    %722 = vmatpush1.xpose.msra.mxu0 0.0
    %723 = vmatprep.subr.mxu0 0.0
    %724 = vmatpush1.xpose.msra.mxu0 0.0
    %725 = vmatprep.subr.mxu0 0.0
    %726 = vmatpush1.xpose.msra.mxu0 0.0
    %727 = vmatprep.subr.mxu0 0.0
    %728 = vmatpush1.xpose.msra.mxu0 0.0
    %729 = vmatprep.subr.mxu0 0.0
    %730 = vmatpush1.xpose.msra.mxu0 0.0
    %731 = vmatprep.subr.mxu0 0.0
    %732 = vmatpush1.xpose.msra.mxu0 0.0
    %733 = vmatprep.subr.mxu0 0.0
    %734 = vmatpush1.xpose.msra.mxu0 0.0
    %735 = vmatprep.subr.mxu0 0.0
    %736 = vmatpush1.xpose.msra.mxu0 0.0
    %737 = vmatprep.subr.mxu0 0.0
    %738 = vmatpush1.xpose.msra.mxu0 0.0
    %739 = vmatprep.subr.mxu0 0.0
    %740 = vmatpush1.xpose.msra.mxu0 0.0
    %741 = vmatprep.subr.mxu0 0.0
    %742 = vmatpush1.xpose.msra.mxu0 0.0
    %743 = vmatprep.subr.mxu0 0.0
    %744 = vmatpush1.xpose.msra.mxu0 0.0
    %745 = vmatprep.subr.mxu0 0.0
    %746 = vmatpush1.xpose.msra.mxu0 0.0
    %747 = vmatprep.subr.mxu0 0.0
    %748 = vmatpush1.xpose.msra.mxu0 0.0
    %749 = vmatprep.subr.mxu0 0.0
    %750 = vmatpush1.xpose.msra.mxu0 0.0
    %751 = vmatprep.subr.mxu0 0.0
    %752 = vmatpush1.xpose.msra.mxu0 0.0
    %753 = vmatprep.subr.mxu0 0.0
    %754 = vmatpush1.xpose.msra.mxu0 0.0
    %755 = vmatprep.subr.mxu0 0.0
    %756 = vmatpush1.xpose.msra.mxu0 0.0
    %757 = vmatprep.subr.mxu0 0.0
    %758 = vmatpush1.xpose.msra.mxu0 0.0
    %759 = vmatprep.subr.mxu0 0.0
    %760 = vmatpush1.xpose.msra.mxu0 0.0
    %761 = vmatprep.subr.mxu0 0.0
    %762 = vmatpush1.xpose.msra.mxu0 0.0
    %763 = vmatprep.subr.mxu0 0.0
    %764 = vmatpush1.xpose.msra.mxu0 0.0
    %765 = vmatprep.subr.mxu0 0.0
    %766 = vmatpush1.xpose.msra.mxu0 0.0
    %767 = vmatprep.subr.mxu0 0.0
    %768 = vmatpush1.xpose.msra.mxu0 0.0
    %769 = vmatprep.subr.mxu0 0.0
    %770 = vmatpush1.xpose.msra.mxu0 0.0
    %771 = vmatprep.mubr.f32.mxu0 0.0
    %772 = vmatmul.mubr.f32.gmra.mrb[0].mxu0 %v703
    %v773 = vpop.f32.mrb[0].mxu0
    %v774 = vadd.f32 0.0, %v773
    %v775 = vpop.f32.mrb[0].mxu0
    %776 = vdwg.mxu0
    %v777 = vsel %vm170, %v242, -inf
    %778 = vmax.xlane.f32.xlu0 %v777
    %v779 = vpop.xlane.xlu0 %778
    %v780 = vsel %vm170, %v318, -inf
    %781 = vmax.xlane.f32.xlu0 %v780
    %v782 = vpop.xlane.xlu0 %781
    %v783 = vsel %vm170, %v394, -inf
    %784 = vmax.xlane.f32.xlu0 %v783
    %v785 = vpop.xlane.xlu0 %784
    %v786 = vsel %vm170, %v470, -inf
    %787 = vmax.xlane.f32.xlu0 %v786
    %v788 = vpop.xlane.xlu0 %787
    %v789 = vsel %vm170, %v546, -inf
    %790 = vmax.xlane.f32.xlu0 %v789
    %v791 = vpop.xlane.xlu0 %790
    %v792 = vsel %vm170, %v622, -inf
    %793 = vmax.xlane.f32.xlu0 %v792
    %v794 = vpop.xlane.xlu0 %793
    %v795 = vsel %vm170, %v698, -inf
    %796 = vmax.xlane.f32.xlu0 %v795
    %v797 = vpop.xlane.xlu0 %796
    %v798 = vsel %vm170, %v774, -inf
    %799 = vmax.xlane.f32.xlu0 %v798
    %v800 = vpop.xlane.xlu0 %799
    %v801 = vsub.f32 %v242, %v779
    %v802 = vsub.f32 %v318, %v782
    %v803 = vsub.f32 %v394, %v785
    %v804 = vsub.f32 %v470, %v788
    %v805 = vsub.f32 %v546, %v791
    %v806 = vsub.f32 %v622, %v794
    %v807 = vsub.f32 %v698, %v797
    %v808 = vsub.f32 %v774, %v800
    %v809 = vmul.f32 %v801, 1.442695
    %v810 = vpow.pop %v809
    %v811 = vmul.f32 %v802, 1.442695
    %v812 = vpow.pop %v811
    %v813 = vmul.f32 %v803, 1.442695
    %v814 = vpow.pop %v813
    %v815 = vmul.f32 %v804, 1.442695
    %v816 = vpow.pop %v815
    %v817 = vmul.f32 %v805, 1.442695
    %v818 = vpow.pop %v817
    %v819 = vmul.f32 %v806, 1.442695
    %v820 = vpow.pop %v819
    %v821 = vmul.f32 %v807, 1.442695
    %v822 = vpow.pop %v821
    %v823 = vmul.f32 %v808, 1.442695
    %v824 = vpow.pop %v823
    %v825 = vsel %vm170, %v810, 0.0
    %826 = vadd.xlane.f32.xlu0 %v825
    %v827 = vpop.xlane.xlu0 %826
    %v828 = vsel %vm170, %v812, 0.0
    %829 = vadd.xlane.f32.xlu0 %v828
    %v830 = vpop.xlane.xlu0 %829
    %v831 = vsel %vm170, %v814, 0.0
    %832 = vadd.xlane.f32.xlu0 %v831
    %v833 = vpop.xlane.xlu0 %832
    %v834 = vsel %vm170, %v816, 0.0
    %835 = vadd.xlane.f32.xlu0 %v834
    %v836 = vpop.xlane.xlu0 %835
    %v837 = vsel %vm170, %v818, 0.0
    %838 = vadd.xlane.f32.xlu0 %v837
    %v839 = vpop.xlane.xlu0 %838
    %v840 = vsel %vm170, %v820, 0.0
    %841 = vadd.xlane.f32.xlu0 %v840
    %v842 = vpop.xlane.xlu0 %841
    %v843 = vsel %vm170, %v822, 0.0
    %844 = vadd.xlane.f32.xlu0 %v843
    %v845 = vpop.xlane.xlu0 %844
    %v846 = vsel %vm170, %v824, 0.0
    %847 = vadd.xlane.f32.xlu0 %v846
    %v848 = vpop.xlane.xlu0 %847
    %849 = vrot.lane.b32.xlu0 %v146, 64
    %v850 = vpop.permute.xlu0 %849
    %v853 = vsel %vm170, %v810, 0
    %855 = vmatprep.subr.mxu0 0.0
    %856 = vmatpush1.msra.mxu0 %v850
    %857 = vmatprep.subr.mxu0 0.0
    %858 = vmatpush1.msra.mxu0 0.0
    %859 = vmatprep.subr.mxu0 0.0
    %860 = vmatpush1.msra.mxu0 0.0
    %861 = vmatprep.subr.mxu0 0.0
    %862 = vmatpush1.msra.mxu0 0.0
    %863 = vmatprep.subr.mxu0 0.0
    %864 = vmatpush1.msra.mxu0 0.0
    %865 = vmatprep.subr.mxu0 0.0
    %866 = vmatpush1.msra.mxu0 0.0
    %867 = vmatprep.subr.mxu0 0.0
    %868 = vmatpush1.msra.mxu0 0.0
    %869 = vmatprep.subr.mxu0 0.0
    %870 = vmatpush1.msra.mxu0 0.0
    %871 = vmatprep.subr.mxu0 0.0
    %872 = vmatpush1.msra.mxu0 0.0
    %873 = vmatprep.subr.mxu0 0.0
    %874 = vmatpush1.msra.mxu0 0.0
    %875 = vmatprep.subr.mxu0 0.0
    %876 = vmatpush1.msra.mxu0 0.0
    %877 = vmatprep.subr.mxu0 0.0
    %878 = vmatpush1.msra.mxu0 0.0
    %879 = vmatprep.subr.mxu0 0.0
    %880 = vmatpush1.msra.mxu0 0.0
    %881 = vmatprep.subr.mxu0 0.0
    %882 = vmatpush1.msra.mxu0 0.0
    %883 = vmatprep.subr.mxu0 0.0
    %884 = vmatpush1.msra.mxu0 0.0
    %885 = vmatprep.subr.mxu0 0.0
    %886 = vmatpush1.msra.mxu0 0.0
    %887 = vmatprep.subr.mxu0 0.0
    %888 = vmatpush1.msra.mxu0 0.0
    %889 = vmatprep.subr.mxu0 0.0
    %890 = vmatpush1.msra.mxu0 0.0
    %891 = vmatprep.subr.mxu0 0.0
    %892 = vmatpush1.msra.mxu0 0.0
    %893 = vmatprep.subr.mxu0 0.0
    %894 = vmatpush1.msra.mxu0 0.0
    %895 = vmatprep.subr.mxu0 0.0
    %896 = vmatpush1.msra.mxu0 0.0
    %897 = vmatprep.subr.mxu0 0.0
    %898 = vmatpush1.msra.mxu0 0.0
    %899 = vmatprep.subr.mxu0 0.0
    %900 = vmatpush1.msra.mxu0 0.0
    %901 = vmatprep.subr.mxu0 0.0
    %902 = vmatpush1.msra.mxu0 0.0
    %903 = vmatprep.subr.mxu0 0.0
    %904 = vmatpush1.msra.mxu0 0.0
    %905 = vmatprep.subr.mxu0 0.0
    %906 = vmatpush1.msra.mxu0 0.0
    %907 = vmatprep.subr.mxu0 0.0
    %908 = vmatpush1.msra.mxu0 0.0
    %909 = vmatprep.subr.mxu0 0.0
    %910 = vmatpush1.msra.mxu0 0.0
    %911 = vmatprep.subr.mxu0 0.0
    %912 = vmatpush1.msra.mxu0 0.0
    %913 = vmatprep.subr.mxu0 0.0
    %914 = vmatpush1.msra.mxu0 0.0
    %915 = vmatprep.subr.mxu0 0.0
    %916 = vmatpush1.msra.mxu0 0.0
    %917 = vmatprep.subr.mxu0 0.0
    %918 = vmatpush1.msra.mxu0 0.0
    %919 = vmatprep.mubr.f32.mxu0 0.0
    %920 = vmatmul.mubr.f32.gmra.mrb[0].mxu0 %v853
    %v921 = vpop.f32.mrb[0].mxu0
    %v922 = vadd.f32 0.0, %v921
    %v923 = vpop.f32.mrb[0].mxu0
    %924 = vdwg.mxu0
    %925 = vrot.lane.b32.xlu0 %v156, 64
    %v926 = vpop.permute.xlu0 %925
    %v929 = vsel %vm170, %v812, 0
    %931 = vmatprep.subr.mxu0 0.0
    %932 = vmatpush1.msra.mxu0 %v926
    %933 = vmatprep.subr.mxu0 0.0
    %934 = vmatpush1.msra.mxu0 0.0
    %935 = vmatprep.subr.mxu0 0.0
    %936 = vmatpush1.msra.mxu0 0.0
    %937 = vmatprep.subr.mxu0 0.0
    %938 = vmatpush1.msra.mxu0 0.0
    %939 = vmatprep.subr.mxu0 0.0
    %940 = vmatpush1.msra.mxu0 0.0
    %941 = vmatprep.subr.mxu0 0.0
    %942 = vmatpush1.msra.mxu0 0.0
    %943 = vmatprep.subr.mxu0 0.0
    %944 = vmatpush1.msra.mxu0 0.0
    %945 = vmatprep.subr.mxu0 0.0
    %946 = vmatpush1.msra.mxu0 0.0
    %947 = vmatprep.subr.mxu0 0.0
    %948 = vmatpush1.msra.mxu0 0.0
    %949 = vmatprep.subr.mxu0 0.0
    %950 = vmatpush1.msra.mxu0 0.0
    %951 = vmatprep.subr.mxu0 0.0
    %952 = vmatpush1.msra.mxu0 0.0
    %953 = vmatprep.subr.mxu0 0.0
    %954 = vmatpush1.msra.mxu0 0.0
    %955 = vmatprep.subr.mxu0 0.0
    %956 = vmatpush1.msra.mxu0 0.0
    %957 = vmatprep.subr.mxu0 0.0
    %958 = vmatpush1.msra.mxu0 0.0
    %959 = vmatprep.subr.mxu0 0.0
    %960 = vmatpush1.msra.mxu0 0.0
    %961 = vmatprep.subr.mxu0 0.0
    %962 = vmatpush1.msra.mxu0 0.0
    %963 = vmatprep.subr.mxu0 0.0
    %964 = vmatpush1.msra.mxu0 0.0
    %965 = vmatprep.subr.mxu0 0.0
    %966 = vmatpush1.msra.mxu0 0.0
    %967 = vmatprep.subr.mxu0 0.0
    %968 = vmatpush1.msra.mxu0 0.0
    %969 = vmatprep.subr.mxu0 0.0
    %970 = vmatpush1.msra.mxu0 0.0
    %971 = vmatprep.subr.mxu0 0.0
    %972 = vmatpush1.msra.mxu0 0.0
    %973 = vmatprep.subr.mxu0 0.0
    %974 = vmatpush1.msra.mxu0 0.0
    %975 = vmatprep.subr.mxu0 0.0
    %976 = vmatpush1.msra.mxu0 0.0
    %977 = vmatprep.subr.mxu0 0.0
    %978 = vmatpush1.msra.mxu0 0.0
    %979 = vmatprep.subr.mxu0 0.0
    %980 = vmatpush1.msra.mxu0 0.0
    %981 = vmatprep.subr.mxu0 0.0
    %982 = vmatpush1.msra.mxu0 0.0
    %983 = vmatprep.subr.mxu0 0.0
    %984 = vmatpush1.msra.mxu0 0.0
    %985 = vmatprep.subr.mxu0 0.0
    %986 = vmatpush1.msra.mxu0 0.0
    %987 = vmatprep.subr.mxu0 0.0
    %988 = vmatpush1.msra.mxu0 0.0
    %989 = vmatprep.subr.mxu0 0.0
    %990 = vmatpush1.msra.mxu0 0.0
    %991 = vmatprep.subr.mxu0 0.0
    %992 = vmatpush1.msra.mxu0 0.0
    %993 = vmatprep.subr.mxu0 0.0
    %994 = vmatpush1.msra.mxu0 0.0
    %995 = vmatprep.mubr.f32.mxu0 0.0
    %996 = vmatmul.mubr.f32.gmra.mrb[0].mxu0 %v929
    %v997 = vpop.f32.mrb[0].mxu0
    %v998 = vadd.f32 0.0, %v997
    %v999 = vpop.f32.mrb[0].mxu0
    %1000 = vdwg.mxu0
    %1001 = vrot.lane.b32.xlu0 %v158, 64
    %v1002 = vpop.permute.xlu0 %1001
    %v1005 = vsel %vm170, %v814, 0
    %1007 = vmatprep.subr.mxu0 0.0
    %1008 = vmatpush1.msra.mxu0 %v1002
    %1009 = vmatprep.subr.mxu0 0.0
    %1010 = vmatpush1.msra.mxu0 0.0
    %1011 = vmatprep.subr.mxu0 0.0
    %1012 = vmatpush1.msra.mxu0 0.0
    %1013 = vmatprep.subr.mxu0 0.0
    %1014 = vmatpush1.msra.mxu0 0.0
    %1015 = vmatprep.subr.mxu0 0.0
    %1016 = vmatpush1.msra.mxu0 0.0
    %1017 = vmatprep.subr.mxu0 0.0
    %1018 = vmatpush1.msra.mxu0 0.0
    %1019 = vmatprep.subr.mxu0 0.0
    %1020 = vmatpush1.msra.mxu0 0.0
    %1021 = vmatprep.subr.mxu0 0.0
    %1022 = vmatpush1.msra.mxu0 0.0
    %1023 = vmatprep.subr.mxu0 0.0
    %1024 = vmatpush1.msra.mxu0 0.0
    %1025 = vmatprep.subr.mxu0 0.0
    %1026 = vmatpush1.msra.mxu0 0.0
    %1027 = vmatprep.subr.mxu0 0.0
    %1028 = vmatpush1.msra.mxu0 0.0
    %1029 = vmatprep.subr.mxu0 0.0
    %1030 = vmatpush1.msra.mxu0 0.0
    %1031 = vmatprep.subr.mxu0 0.0
    %1032 = vmatpush1.msra.mxu0 0.0
    %1033 = vmatprep.subr.mxu0 0.0
    %1034 = vmatpush1.msra.mxu0 0.0
    %1035 = vmatprep.subr.mxu0 0.0
    %1036 = vmatpush1.msra.mxu0 0.0
    %1037 = vmatprep.subr.mxu0 0.0
    %1038 = vmatpush1.msra.mxu0 0.0
    %1039 = vmatprep.subr.mxu0 0.0
    %1040 = vmatpush1.msra.mxu0 0.0
    %1041 = vmatprep.subr.mxu0 0.0
    %1042 = vmatpush1.msra.mxu0 0.0
    %1043 = vmatprep.subr.mxu0 0.0
    %1044 = vmatpush1.msra.mxu0 0.0
    %1045 = vmatprep.subr.mxu0 0.0
    %1046 = vmatpush1.msra.mxu0 0.0
    %1047 = vmatprep.subr.mxu0 0.0
    %1048 = vmatpush1.msra.mxu0 0.0
    %1049 = vmatprep.subr.mxu0 0.0
    %1050 = vmatpush1.msra.mxu0 0.0
    %1051 = vmatprep.subr.mxu0 0.0
    %1052 = vmatpush1.msra.mxu0 0.0
    %1053 = vmatprep.subr.mxu0 0.0
    %1054 = vmatpush1.msra.mxu0 0.0
    %1055 = vmatprep.subr.mxu0 0.0
    %1056 = vmatpush1.msra.mxu0 0.0
    %1057 = vmatprep.subr.mxu0 0.0
    %1058 = vmatpush1.msra.mxu0 0.0
    %1059 = vmatprep.subr.mxu0 0.0
    %1060 = vmatpush1.msra.mxu0 0.0
    %1061 = vmatprep.subr.mxu0 0.0
    %1062 = vmatpush1.msra.mxu0 0.0
    %1063 = vmatprep.subr.mxu0 0.0
    %1064 = vmatpush1.msra.mxu0 0.0
    %1065 = vmatprep.subr.mxu0 0.0
    %1066 = vmatpush1.msra.mxu0 0.0
    %1067 = vmatprep.subr.mxu0 0.0
    %1068 = vmatpush1.msra.mxu0 0.0
    %1069 = vmatprep.subr.mxu0 0.0
    %1070 = vmatpush1.msra.mxu0 0.0
    %1071 = vmatprep.mubr.f32.mxu0 0.0
    %1072 = vmatmul.mubr.f32.gmra.mrb[0].mxu0 %v1005
    %v1073 = vpop.f32.mrb[0].mxu0
    %v1074 = vadd.f32 0.0, %v1073
    %v1075 = vpop.f32.mrb[0].mxu0
    %1076 = vdwg.mxu0
    %1077 = vrot.lane.b32.xlu0 %v160, 64
    %v1078 = vpop.permute.xlu0 %1077
    %v1081 = vsel %vm170, %v816, 0
    %1083 = vmatprep.subr.mxu0 0.0
    %1084 = vmatpush1.msra.mxu0 %v1078
    %1085 = vmatprep.subr.mxu0 0.0
    %1086 = vmatpush1.msra.mxu0 0.0
    %1087 = vmatprep.subr.mxu0 0.0
    %1088 = vmatpush1.msra.mxu0 0.0
    %1089 = vmatprep.subr.mxu0 0.0
    %1090 = vmatpush1.msra.mxu0 0.0
    %1091 = vmatprep.subr.mxu0 0.0
    %1092 = vmatpush1.msra.mxu0 0.0
    %1093 = vmatprep.subr.mxu0 0.0
    %1094 = vmatpush1.msra.mxu0 0.0
    %1095 = vmatprep.subr.mxu0 0.0
    %1096 = vmatpush1.msra.mxu0 0.0
    %1097 = vmatprep.subr.mxu0 0.0
    %1098 = vmatpush1.msra.mxu0 0.0
    %1099 = vmatprep.subr.mxu0 0.0
    %1100 = vmatpush1.msra.mxu0 0.0
    %1101 = vmatprep.subr.mxu0 0.0
    %1102 = vmatpush1.msra.mxu0 0.0
    %1103 = vmatprep.subr.mxu0 0.0
    %1104 = vmatpush1.msra.mxu0 0.0
    %1105 = vmatprep.subr.mxu0 0.0
    %1106 = vmatpush1.msra.mxu0 0.0
    %1107 = vmatprep.subr.mxu0 0.0
    %1108 = vmatpush1.msra.mxu0 0.0
    %1109 = vmatprep.subr.mxu0 0.0
    %1110 = vmatpush1.msra.mxu0 0.0
    %1111 = vmatprep.subr.mxu0 0.0
    %1112 = vmatpush1.msra.mxu0 0.0
    %1113 = vmatprep.subr.mxu0 0.0
    %1114 = vmatpush1.msra.mxu0 0.0
    %1115 = vmatprep.subr.mxu0 0.0
    %1116 = vmatpush1.msra.mxu0 0.0
    %1117 = vmatprep.subr.mxu0 0.0
    %1118 = vmatpush1.msra.mxu0 0.0
    %1119 = vmatprep.subr.mxu0 0.0
    %1120 = vmatpush1.msra.mxu0 0.0
    %1121 = vmatprep.subr.mxu0 0.0
    %1122 = vmatpush1.msra.mxu0 0.0
    %1123 = vmatprep.subr.mxu0 0.0
    %1124 = vmatpush1.msra.mxu0 0.0
    %1125 = vmatprep.subr.mxu0 0.0
    %1126 = vmatpush1.msra.mxu0 0.0
    %1127 = vmatprep.subr.mxu0 0.0
    %1128 = vmatpush1.msra.mxu0 0.0
    %1129 = vmatprep.subr.mxu0 0.0
    %1130 = vmatpush1.msra.mxu0 0.0
    %1131 = vmatprep.subr.mxu0 0.0
    %1132 = vmatpush1.msra.mxu0 0.0
    %1133 = vmatprep.subr.mxu0 0.0
    %1134 = vmatpush1.msra.mxu0 0.0
    %1135 = vmatprep.subr.mxu0 0.0
    %1136 = vmatpush1.msra.mxu0 0.0
    %1137 = vmatprep.subr.mxu0 0.0
    %1138 = vmatpush1.msra.mxu0 0.0
    %1139 = vmatprep.subr.mxu0 0.0
    %1140 = vmatpush1.msra.mxu0 0.0
    %1141 = vmatprep.subr.mxu0 0.0
    %1142 = vmatpush1.msra.mxu0 0.0
    %1143 = vmatprep.subr.mxu0 0.0
    %1144 = vmatpush1.msra.mxu0 0.0
    %1145 = vmatprep.subr.mxu0 0.0
    %1146 = vmatpush1.msra.mxu0 0.0
    %1147 = vmatprep.mubr.f32.mxu0 0.0
    %1148 = vmatmul.mubr.f32.gmra.mrb[0].mxu0 %v1081
    %v1149 = vpop.f32.mrb[0].mxu0
    %v1150 = vadd.f32 0.0, %v1149
    %v1151 = vpop.f32.mrb[0].mxu0
    %1152 = vdwg.mxu0
    %1153 = vrot.lane.b32.xlu0 %v151, 64
    %v1154 = vpop.permute.xlu0 %1153
    %v1157 = vsel %vm170, %v818, 0
    %1159 = vmatprep.subr.mxu0 0.0
    %1160 = vmatpush1.msra.mxu0 %v1154
    %1161 = vmatprep.subr.mxu0 0.0
    %1162 = vmatpush1.msra.mxu0 0.0
    %1163 = vmatprep.subr.mxu0 0.0
    %1164 = vmatpush1.msra.mxu0 0.0
    %1165 = vmatprep.subr.mxu0 0.0
    %1166 = vmatpush1.msra.mxu0 0.0
    %1167 = vmatprep.subr.mxu0 0.0
    %1168 = vmatpush1.msra.mxu0 0.0
    %1169 = vmatprep.subr.mxu0 0.0
    %1170 = vmatpush1.msra.mxu0 0.0
    %1171 = vmatprep.subr.mxu0 0.0
    %1172 = vmatpush1.msra.mxu0 0.0
    %1173 = vmatprep.subr.mxu0 0.0
    %1174 = vmatpush1.msra.mxu0 0.0
    %1175 = vmatprep.subr.mxu0 0.0
    %1176 = vmatpush1.msra.mxu0 0.0
    %1177 = vmatprep.subr.mxu0 0.0
    %1178 = vmatpush1.msra.mxu0 0.0
    %1179 = vmatprep.subr.mxu0 0.0
    %1180 = vmatpush1.msra.mxu0 0.0
    %1181 = vmatprep.subr.mxu0 0.0
    %1182 = vmatpush1.msra.mxu0 0.0
    %1183 = vmatprep.subr.mxu0 0.0
    %1184 = vmatpush1.msra.mxu0 0.0
    %1185 = vmatprep.subr.mxu0 0.0
    %1186 = vmatpush1.msra.mxu0 0.0
    %1187 = vmatprep.subr.mxu0 0.0
    %1188 = vmatpush1.msra.mxu0 0.0
    %1189 = vmatprep.subr.mxu0 0.0
    %1190 = vmatpush1.msra.mxu0 0.0
    %1191 = vmatprep.subr.mxu0 0.0
    %1192 = vmatpush1.msra.mxu0 0.0
    %1193 = vmatprep.subr.mxu0 0.0
    %1194 = vmatpush1.msra.mxu0 0.0
    %1195 = vmatprep.subr.mxu0 0.0
    %1196 = vmatpush1.msra.mxu0 0.0
    %1197 = vmatprep.subr.mxu0 0.0
    %1198 = vmatpush1.msra.mxu0 0.0
    %1199 = vmatprep.subr.mxu0 0.0
    %1200 = vmatpush1.msra.mxu0 0.0
    %1201 = vmatprep.subr.mxu0 0.0
    %1202 = vmatpush1.msra.mxu0 0.0
    %1203 = vmatprep.subr.mxu0 0.0
    %1204 = vmatpush1.msra.mxu0 0.0
    %1205 = vmatprep.subr.mxu0 0.0
    %1206 = vmatpush1.msra.mxu0 0.0
    %1207 = vmatprep.subr.mxu0 0.0
    %1208 = vmatpush1.msra.mxu0 0.0
    %1209 = vmatprep.subr.mxu0 0.0
    %1210 = vmatpush1.msra.mxu0 0.0
    %1211 = vmatprep.subr.mxu0 0.0
    %1212 = vmatpush1.msra.mxu0 0.0
    %1213 = vmatprep.subr.mxu0 0.0
    %1214 = vmatpush1.msra.mxu0 0.0
    %1215 = vmatprep.subr.mxu0 0.0
    %1216 = vmatpush1.msra.mxu0 0.0
    %1217 = vmatprep.subr.mxu0 0.0
    %1218 = vmatpush1.msra.mxu0 0.0
    %1219 = vmatprep.subr.mxu0 0.0
    %1220 = vmatpush1.msra.mxu0 0.0
    %1221 = vmatprep.subr.mxu0 0.0
    %1222 = vmatpush1.msra.mxu0 0.0
    %1223 = vmatprep.mubr.f32.mxu0 0.0
    %1224 = vmatmul.mubr.f32.gmra.mrb[0].mxu0 %v1157
    %v1225 = vpop.f32.mrb[0].mxu0
    %v1226 = vadd.f32 0.0, %v1225
    %v1227 = vpop.f32.mrb[0].mxu0
    %1228 = vdwg.mxu0
    %1229 = vrot.lane.b32.xlu0 %v163, 64
    %v1230 = vpop.permute.xlu0 %1229
    %v1233 = vsel %vm170, %v820, 0
    %1235 = vmatprep.subr.mxu0 0.0
    %1236 = vmatpush1.msra.mxu0 %v1230
    %1237 = vmatprep.subr.mxu0 0.0
    %1238 = vmatpush1.msra.mxu0 0.0
    %1239 = vmatprep.subr.mxu0 0.0
    %1240 = vmatpush1.msra.mxu0 0.0
    %1241 = vmatprep.subr.mxu0 0.0
    %1242 = vmatpush1.msra.mxu0 0.0
    %1243 = vmatprep.subr.mxu0 0.0
    %1244 = vmatpush1.msra.mxu0 0.0
    %1245 = vmatprep.subr.mxu0 0.0
    %1246 = vmatpush1.msra.mxu0 0.0
    %1247 = vmatprep.subr.mxu0 0.0
    %1248 = vmatpush1.msra.mxu0 0.0
    %1249 = vmatprep.subr.mxu0 0.0
    %1250 = vmatpush1.msra.mxu0 0.0
    %1251 = vmatprep.subr.mxu0 0.0
    %1252 = vmatpush1.msra.mxu0 0.0
    %1253 = vmatprep.subr.mxu0 0.0
    %1254 = vmatpush1.msra.mxu0 0.0
    %1255 = vmatprep.subr.mxu0 0.0
    %1256 = vmatpush1.msra.mxu0 0.0
    %1257 = vmatprep.subr.mxu0 0.0
    %1258 = vmatpush1.msra.mxu0 0.0
    %1259 = vmatprep.subr.mxu0 0.0
    %1260 = vmatpush1.msra.mxu0 0.0
    %1261 = vmatprep.subr.mxu0 0.0
    %1262 = vmatpush1.msra.mxu0 0.0
    %1263 = vmatprep.subr.mxu0 0.0
    %1264 = vmatpush1.msra.mxu0 0.0
    %1265 = vmatprep.subr.mxu0 0.0
    %1266 = vmatpush1.msra.mxu0 0.0
    %1267 = vmatprep.subr.mxu0 0.0
    %1268 = vmatpush1.msra.mxu0 0.0
    %1269 = vmatprep.subr.mxu0 0.0
    %1270 = vmatpush1.msra.mxu0 0.0
    %1271 = vmatprep.subr.mxu0 0.0
    %1272 = vmatpush1.msra.mxu0 0.0
    %1273 = vmatprep.subr.mxu0 0.0
    %1274 = vmatpush1.msra.mxu0 0.0
    %1275 = vmatprep.subr.mxu0 0.0
    %1276 = vmatpush1.msra.mxu0 0.0
    %1277 = vmatprep.subr.mxu0 0.0
    %1278 = vmatpush1.msra.mxu0 0.0
    %1279 = vmatprep.subr.mxu0 0.0
    %1280 = vmatpush1.msra.mxu0 0.0
    %1281 = vmatprep.subr.mxu0 0.0
    %1282 = vmatpush1.msra.mxu0 0.0
    %1283 = vmatprep.subr.mxu0 0.0
    %1284 = vmatpush1.msra.mxu0 0.0
    %1285 = vmatprep.subr.mxu0 0.0
    %1286 = vmatpush1.msra.mxu0 0.0
    %1287 = vmatprep.subr.mxu0 0.0
    %1288 = vmatpush1.msra.mxu0 0.0
    %1289 = vmatprep.subr.mxu0 0.0
    %1290 = vmatpush1.msra.mxu0 0.0
    %1291 = vmatprep.subr.mxu0 0.0
    %1292 = vmatpush1.msra.mxu0 0.0
    %1293 = vmatprep.subr.mxu0 0.0
    %1294 = vmatpush1.msra.mxu0 0.0
    %1295 = vmatprep.subr.mxu0 0.0
    %1296 = vmatpush1.msra.mxu0 0.0
    %1297 = vmatprep.subr.mxu0 0.0
    %1298 = vmatpush1.msra.mxu0 0.0
    %1299 = vmatprep.mubr.f32.mxu0 0.0
    %1300 = vmatmul.mubr.f32.gmra.mrb[0].mxu0 %v1233
    %v1301 = vpop.f32.mrb[0].mxu0
    %v1302 = vadd.f32 0.0, %v1301
    %v1303 = vpop.f32.mrb[0].mxu0
    %1304 = vdwg.mxu0
    %1305 = vrot.lane.b32.xlu0 %v165, 64
    %v1306 = vpop.permute.xlu0 %1305
    %v1309 = vsel %vm170, %v822, 0
    %1311 = vmatprep.subr.mxu0 0.0
    %1312 = vmatpush1.msra.mxu0 %v1306
    %1313 = vmatprep.subr.mxu0 0.0
    %1314 = vmatpush1.msra.mxu0 0.0
    %1315 = vmatprep.subr.mxu0 0.0
    %1316 = vmatpush1.msra.mxu0 0.0
    %1317 = vmatprep.subr.mxu0 0.0
    %1318 = vmatpush1.msra.mxu0 0.0
    %1319 = vmatprep.subr.mxu0 0.0
    %1320 = vmatpush1.msra.mxu0 0.0
    %1321 = vmatprep.subr.mxu0 0.0
    %1322 = vmatpush1.msra.mxu0 0.0
    %1323 = vmatprep.subr.mxu0 0.0
    %1324 = vmatpush1.msra.mxu0 0.0
    %1325 = vmatprep.subr.mxu0 0.0
    %1326 = vmatpush1.msra.mxu0 0.0
    %1327 = vmatprep.subr.mxu0 0.0
    %1328 = vmatpush1.msra.mxu0 0.0
    %1329 = vmatprep.subr.mxu0 0.0
    %1330 = vmatpush1.msra.mxu0 0.0
    %1331 = vmatprep.subr.mxu0 0.0
    %1332 = vmatpush1.msra.mxu0 0.0
    %1333 = vmatprep.subr.mxu0 0.0
    %1334 = vmatpush1.msra.mxu0 0.0
    %1335 = vmatprep.subr.mxu0 0.0
    %1336 = vmatpush1.msra.mxu0 0.0
    %1337 = vmatprep.subr.mxu0 0.0
    %1338 = vmatpush1.msra.mxu0 0.0
    %1339 = vmatprep.subr.mxu0 0.0
    %1340 = vmatpush1.msra.mxu0 0.0
    %1341 = vmatprep.subr.mxu0 0.0
    %1342 = vmatpush1.msra.mxu0 0.0
    %1343 = vmatprep.subr.mxu0 0.0
    %1344 = vmatpush1.msra.mxu0 0.0
    %1345 = vmatprep.subr.mxu0 0.0
    %1346 = vmatpush1.msra.mxu0 0.0
    %1347 = vmatprep.subr.mxu0 0.0
    %1348 = vmatpush1.msra.mxu0 0.0
    %1349 = vmatprep.subr.mxu0 0.0
    %1350 = vmatpush1.msra.mxu0 0.0
    %1351 = vmatprep.subr.mxu0 0.0
    %1352 = vmatpush1.msra.mxu0 0.0
    %1353 = vmatprep.subr.mxu0 0.0
    %1354 = vmatpush1.msra.mxu0 0.0
    %1355 = vmatprep.subr.mxu0 0.0
    %1356 = vmatpush1.msra.mxu0 0.0
    %1357 = vmatprep.subr.mxu0 0.0
    %1358 = vmatpush1.msra.mxu0 0.0
    %1359 = vmatprep.subr.mxu0 0.0
    %1360 = vmatpush1.msra.mxu0 0.0
    %1361 = vmatprep.subr.mxu0 0.0
    %1362 = vmatpush1.msra.mxu0 0.0
    %1363 = vmatprep.subr.mxu0 0.0
    %1364 = vmatpush1.msra.mxu0 0.0
    %1365 = vmatprep.subr.mxu0 0.0
    %1366 = vmatpush1.msra.mxu0 0.0
    %1367 = vmatprep.subr.mxu0 0.0
    %1368 = vmatpush1.msra.mxu0 0.0
    %1369 = vmatprep.subr.mxu0 0.0
    %1370 = vmatpush1.msra.mxu0 0.0
    %1371 = vmatprep.subr.mxu0 0.0
    %1372 = vmatpush1.msra.mxu0 0.0
    %1373 = vmatprep.subr.mxu0 0.0
    %1374 = vmatpush1.msra.mxu0 0.0
    %1375 = vmatprep.mubr.f32.mxu0 0.0
    %1376 = vmatmul.mubr.f32.gmra.mrb[0].mxu0 %v1309
    %v1377 = vpop.f32.mrb[0].mxu0
    %v1378 = vadd.f32 0.0, %v1377
    %v1379 = vpop.f32.mrb[0].mxu0
    %1380 = vdwg.mxu0
    %1381 = vrot.lane.b32.xlu0 %v167, 64
    %v1382 = vpop.permute.xlu0 %1381
    %v1385 = vsel %vm170, %v824, 0
    %1387 = vmatprep.subr.mxu0 0.0
    %1388 = vmatpush1.msra.mxu0 %v1382
    %1389 = vmatprep.subr.mxu0 0.0
    %1390 = vmatpush1.msra.mxu0 0.0
    %1391 = vmatprep.subr.mxu0 0.0
    %1392 = vmatpush1.msra.mxu0 0.0
    %1393 = vmatprep.subr.mxu0 0.0
    %1394 = vmatpush1.msra.mxu0 0.0
    %1395 = vmatprep.subr.mxu0 0.0
    %1396 = vmatpush1.msra.mxu0 0.0
    %1397 = vmatprep.subr.mxu0 0.0
    %1398 = vmatpush1.msra.mxu0 0.0
    %1399 = vmatprep.subr.mxu0 0.0
    %1400 = vmatpush1.msra.mxu0 0.0
    %1401 = vmatprep.subr.mxu0 0.0
    %1402 = vmatpush1.msra.mxu0 0.0
    %1403 = vmatprep.subr.mxu0 0.0
    %1404 = vmatpush1.msra.mxu0 0.0
    %1405 = vmatprep.subr.mxu0 0.0
    %1406 = vmatpush1.msra.mxu0 0.0
    %1407 = vmatprep.subr.mxu0 0.0
    %1408 = vmatpush1.msra.mxu0 0.0
    %1409 = vmatprep.subr.mxu0 0.0
    %1410 = vmatpush1.msra.mxu0 0.0
    %1411 = vmatprep.subr.mxu0 0.0
    %1412 = vmatpush1.msra.mxu0 0.0
    %1413 = vmatprep.subr.mxu0 0.0
    %1414 = vmatpush1.msra.mxu0 0.0
    %1415 = vmatprep.subr.mxu0 0.0
    %1416 = vmatpush1.msra.mxu0 0.0
    %1417 = vmatprep.subr.mxu0 0.0
    %1418 = vmatpush1.msra.mxu0 0.0
    %1419 = vmatprep.subr.mxu0 0.0
    %1420 = vmatpush1.msra.mxu0 0.0
    %1421 = vmatprep.subr.mxu0 0.0
    %1422 = vmatpush1.msra.mxu0 0.0
    %1423 = vmatprep.subr.mxu0 0.0
    %1424 = vmatpush1.msra.mxu0 0.0
    %1425 = vmatprep.subr.mxu0 0.0
    %1426 = vmatpush1.msra.mxu0 0.0
    %1427 = vmatprep.subr.mxu0 0.0
    %1428 = vmatpush1.msra.mxu0 0.0
    %1429 = vmatprep.subr.mxu0 0.0
    %1430 = vmatpush1.msra.mxu0 0.0
    %1431 = vmatprep.subr.mxu0 0.0
    %1432 = vmatpush1.msra.mxu0 0.0
    %1433 = vmatprep.subr.mxu0 0.0
    %1434 = vmatpush1.msra.mxu0 0.0
    %1435 = vmatprep.subr.mxu0 0.0
    %1436 = vmatpush1.msra.mxu0 0.0
    %1437 = vmatprep.subr.mxu0 0.0
    %1438 = vmatpush1.msra.mxu0 0.0
    %1439 = vmatprep.subr.mxu0 0.0
    %1440 = vmatpush1.msra.mxu0 0.0
    %1441 = vmatprep.subr.mxu0 0.0
    %1442 = vmatpush1.msra.mxu0 0.0
    %1443 = vmatprep.subr.mxu0 0.0
    %1444 = vmatpush1.msra.mxu0 0.0
    %1445 = vmatprep.subr.mxu0 0.0
    %1446 = vmatpush1.msra.mxu0 0.0
    %1447 = vmatprep.subr.mxu0 0.0
    %1448 = vmatpush1.msra.mxu0 0.0
    %1449 = vmatprep.subr.mxu0 0.0
    %1450 = vmatpush1.msra.mxu0 0.0
    %1451 = vmatprep.mubr.f32.mxu0 0.0
    %1452 = vmatmul.mubr.f32.gmra.mrb[0].mxu0 %v1385
    %v1453 = vpop.f32.mrb[0].mxu0
    %v1454 = vadd.f32 0.0, %v1453
    %v1455 = vpop.f32.mrb[0].mxu0
    %1456 = vdwg.mxu0
    %v1457 = vrcp.pop %v827
    %v1458 = vmul.f32 %v922, %v1457
    %v1459 = vrcp.pop %v830
    %v1460 = vmul.f32 %v998, %v1459
    %v1461 = vrcp.pop %v833
    %v1462 = vmul.f32 %v1074, %v1461
    %v1463 = vrcp.pop %v836
    %v1464 = vmul.f32 %v1150, %v1463
    %v1465 = vrcp.pop %v839
    %v1466 = vmul.f32 %v1226, %v1465
    %v1467 = vrcp.pop %v842
    %v1468 = vmul.f32 %v1302, %v1467
    %v1469 = vrcp.pop %v845
    %v1470 = vmul.f32 %v1378, %v1469
    %v1471 = vrcp.pop %v848
    %v1472 = vmul.f32 %v1454, %v1471
    %1474 = vrot.lane.b32.xlu0 %v1460, 8
    %v1475 = vpop.permute.xlu0 %1474
    %1478 = vrot.lane.b32.xlu0 %v1462, 16
    %v1479 = vpop.permute.xlu0 %1478
    %1482 = vrot.lane.b32.xlu0 %v1464, 24
    %v1483 = vpop.permute.xlu0 %1482
    %v1485 = vsel %vm170, %v1458, %v1475
    %vm1486 = vcmask 130048
    %v1487 = vsel %vm1486, %v1485, %v1479
    %vm1488 = vcmask 195584
    %v1489 = vsel %vm1488, %v1487, %v1483
    %1491 = vrot.lane.b32.xlu0 %v1468, 8
    %v1492 = vpop.permute.xlu0 %1491
    %1495 = vrot.lane.b32.xlu0 %v1470, 16
    %v1496 = vpop.permute.xlu0 %1495
    %1499 = vrot.lane.b32.xlu0 %v1472, 24
    %v1500 = vpop.permute.xlu0 %1499
    %v1502 = vsel %vm170, %v1466, %v1492
    %v1503 = vsel %vm1486, %v1502, %v1496
    %v1504 = vsel %vm1488, %v1503, %v1500
    %v1505 = vld [vmem:[%s3] sm:$0xff]
    %v1506 = vld [vmem:[%s3 + $0x8] sm:$0xff]
    %v1507 = vld [vmem:[%s3 + $0x10] sm:$0xff]
    %v1508 = vld [vmem:[%s3 + $0x18] sm:$0xff]
    %v1509 = vld [vmem:[%s4] sm:$0x1]
    %v1511 = vlaneseq
    %v1512 = vshrl.u32 %v1511, 7
    %v1513 = vsub.s32 0, %v1512
    %v1514 = vrot.slane %v1509, %v1513
    %v1517 = vsel %vm72, %v1489, 0
    %v1520 = vsel %vm72, %v1504, 0
    %1522 = vmatprep.subr.mxu0 0.0
    %1523 = vmatpush1.msra.mxu0 %v1505
    %1524 = vmatprep.subr.mxu0 0.0
    %1525 = vmatpush1.msra.mxu0 %v1506
    %1526 = vmatprep.subr.mxu0 0.0
    %1527 = vmatpush1.msra.mxu0 %v1507
    %1528 = vmatprep.subr.mxu0 0.0
    %1529 = vmatpush1.msra.mxu0 %v1508
    %1530 = vmatprep.subr.mxu0 0.0
    %1531 = vmatpush1.msra.mxu0 0.0
    %1532 = vmatprep.subr.mxu0 0.0
    %1533 = vmatpush1.msra.mxu0 0.0
    %1534 = vmatprep.subr.mxu0 0.0
    %1535 = vmatpush1.msra.mxu0 0.0
    %1536 = vmatprep.subr.mxu0 0.0
    %1537 = vmatpush1.msra.mxu0 0.0
    %1538 = vmatprep.subr.mxu0 0.0
    %1539 = vmatpush1.msra.mxu0 0.0
    %1540 = vmatprep.subr.mxu0 0.0
    %1541 = vmatpush1.msra.mxu0 0.0
    %1542 = vmatprep.subr.mxu0 0.0
    %1543 = vmatpush1.msra.mxu0 0.0
    %1544 = vmatprep.subr.mxu0 0.0
    %1545 = vmatpush1.msra.mxu0 0.0
    %1546 = vmatprep.subr.mxu0 0.0
    %1547 = vmatpush1.msra.mxu0 0.0
    %1548 = vmatprep.subr.mxu0 0.0
    %1549 = vmatpush1.msra.mxu0 0.0
    %1550 = vmatprep.subr.mxu0 0.0
    %1551 = vmatpush1.msra.mxu0 0.0
    %1552 = vmatprep.subr.mxu0 0.0
    %1553 = vmatpush1.msra.mxu0 0.0
    %1554 = vmatprep.subr.mxu0 0.0
    %1555 = vmatpush1.msra.mxu0 0.0
    %1556 = vmatprep.subr.mxu0 0.0
    %1557 = vmatpush1.msra.mxu0 0.0
    %1558 = vmatprep.subr.mxu0 0.0
    %1559 = vmatpush1.msra.mxu0 0.0
    %1560 = vmatprep.subr.mxu0 0.0
    %1561 = vmatpush1.msra.mxu0 0.0
    %1562 = vmatprep.subr.mxu0 0.0
    %1563 = vmatpush1.msra.mxu0 0.0
    %1564 = vmatprep.subr.mxu0 0.0
    %1565 = vmatpush1.msra.mxu0 0.0
    %1566 = vmatprep.subr.mxu0 0.0
    %1567 = vmatpush1.msra.mxu0 0.0
    %1568 = vmatprep.subr.mxu0 0.0
    %1569 = vmatpush1.msra.mxu0 0.0
    %1570 = vmatprep.subr.mxu0 0.0
    %1571 = vmatpush1.msra.mxu0 0.0
    %1572 = vmatprep.subr.mxu0 0.0
    %1573 = vmatpush1.msra.mxu0 0.0
    %1574 = vmatprep.subr.mxu0 0.0
    %1575 = vmatpush1.msra.mxu0 0.0
    %1576 = vmatprep.subr.mxu0 0.0
    %1577 = vmatpush1.msra.mxu0 0.0
    %1578 = vmatprep.subr.mxu0 0.0
    %1579 = vmatpush1.msra.mxu0 0.0
    %1580 = vmatprep.subr.mxu0 0.0
    %1581 = vmatpush1.msra.mxu0 0.0
    %1582 = vmatprep.subr.mxu0 0.0
    %1583 = vmatpush1.msra.mxu0 0.0
    %1584 = vmatprep.subr.mxu0 0.0
    %1585 = vmatpush1.msra.mxu0 0.0
    %1586 = vmatprep.mubr.f32.mxu0 0.0
    %1587 = vmatmul.mubr.f32.gmra.mrb[0].mxu0 %v1517
    %v1588 = vpop.f32.mrb[0].mxu0
    %v1589 = vadd.f32 %v1514, %v1588
    %v1590 = vpop.f32.mrb[0].mxu0
    %1591 = vmatprep.mubr.f32.mxu0 0.0
    %1592 = vmatmul.mubr.f32.gmra.mrb[0].mxu0 %v1520
    %v1593 = vpop.f32.mrb[0].mxu0
    %v1594 = vadd.f32 %v1514, %v1593
    %v1595 = vpop.f32.mrb[0].mxu0
    %1596 = vdwg.mxu0
    %v1597 = vadd.f32 %v59, %v1589
    %v1598 = vadd.f32 %v60, %v1594
    %v1599 = vld [vmem:[%s9] sm:$0x1]
    %v1600 = vld [vmem:[%s10] sm:$0x1]
    %v1601 = vsel %vm72, %v1597, 0.0
    %1602 = vadd.xlane.f32.xlu0 %v1601
    %v1603 = vpop.xlane.xlu0 %1602
    %v1604 = vsel %vm72, %v1598, 0.0
    %1605 = vadd.xlane.f32.xlu0 %v1604
    %v1606 = vpop.xlane.xlu0 %1605
    %v1607 = vrcp.pop 32.0
    %v1608 = vmul.f32 %v1603, %v1607
    %v1609 = vmul.f32 %v1606, %v1607
    %v1610 = vsub.f32 %v1597, %v1608
    %v1611 = vsub.f32 %v1598, %v1609
    %v1612 = vmul.f32 %v1610, %v1610
    %v1613 = vmul.f32 %v1611, %v1611
    %v1614 = vsel %vm72, %v1612, 0.0
    %1615 = vadd.xlane.f32.xlu0 %v1614
    %v1616 = vpop.xlane.xlu0 %1615
    %v1617 = vsel %vm72, %v1613, 0.0
    %1618 = vadd.xlane.f32.xlu0 %v1617
    %v1619 = vpop.xlane.xlu0 %1618
    %v1620 = vmul.f32 %v1616, %v1607
    %v1621 = vmul.f32 %v1619, %v1607
    %v1622 = vadd.f32 %v1620, 1e-05
    %v1623 = vadd.f32 %v1621, 1e-05
    %v1624 = vrsqrt.pop %v1622
    %v1625 = vrsqrt.pop %v1623
    %v1626 = vmul.f32 %v1610, %v1624
    %v1627 = vmul.f32 %v1611, %v1625
    %v1629 = vlaneseq
    %v1630 = vshrl.u32 %v1629, 7
    %v1631 = vsub.s32 0, %v1630
    %v1632 = vrot.slane %v1599, %v1631
    %v1634 = vmul.f32 %v1626, %v1632
    %v1635 = vmul.f32 %v1627, %v1632
    %v1637 = vlaneseq
    %v1638 = vshrl.u32 %v1637, 7
    %v1639 = vsub.s32 0, %v1638
    %v1640 = vrot.slane %v1600, %v1639
    %v1642 = vadd.f32 %v1634, %v1640
    %v1643 = vadd.f32 %v1635, %v1640
    %v1644 = vld [vmem:[%s5] sm:$0xff]
    %v1645 = vld [vmem:[%s5 + $0x8] sm:$0xff]
    %v1646 = vld [vmem:[%s5 + $0x10] sm:$0xff]
    %v1647 = vld [vmem:[%s5 + $0x18] sm:$0xff]
    %v1648 = vld [vmem:[%s6] sm:$0x1]
    %v1650 = vlaneseq
    %v1651 = vshrl.u32 %v1650, 7
    %v1652 = vsub.s32 0, %v1651
    %v1653 = vrot.slane %v1648, %v1652
    %v1656 = vsel %vm72, %v1642, 0
    %v1659 = vsel %vm72, %v1643, 0
    %1661 = vmatprep.subr.mxu0 0.0
    %1662 = vmatpush1.msra.mxu0 %v1644
    %1663 = vmatprep.subr.mxu0 0.0
    %1664 = vmatpush1.msra.mxu0 %v1645
    %1665 = vmatprep.subr.mxu0 0.0
    %1666 = vmatpush1.msra.mxu0 %v1646
    %1667 = vmatprep.subr.mxu0 0.0
    %1668 = vmatpush1.msra.mxu0 %v1647
    %1669 = vmatprep.subr.mxu0 0.0
    %1670 = vmatpush1.msra.mxu0 0.0
    %1671 = vmatprep.subr.mxu0 0.0
    %1672 = vmatpush1.msra.mxu0 0.0
    %1673 = vmatprep.subr.mxu0 0.0
    %1674 = vmatpush1.msra.mxu0 0.0
    %1675 = vmatprep.subr.mxu0 0.0
    %1676 = vmatpush1.msra.mxu0 0.0
    %1677 = vmatprep.subr.mxu0 0.0
    %1678 = vmatpush1.msra.mxu0 0.0
    %1679 = vmatprep.subr.mxu0 0.0
    %1680 = vmatpush1.msra.mxu0 0.0
    %1681 = vmatprep.subr.mxu0 0.0
    %1682 = vmatpush1.msra.mxu0 0.0
    %1683 = vmatprep.subr.mxu0 0.0
    %1684 = vmatpush1.msra.mxu0 0.0
    %1685 = vmatprep.subr.mxu0 0.0
    %1686 = vmatpush1.msra.mxu0 0.0
    %1687 = vmatprep.subr.mxu0 0.0
    %1688 = vmatpush1.msra.mxu0 0.0
    %1689 = vmatprep.subr.mxu0 0.0
    %1690 = vmatpush1.msra.mxu0 0.0
    %1691 = vmatprep.subr.mxu0 0.0
    %1692 = vmatpush1.msra.mxu0 0.0
    %1693 = vmatprep.subr.mxu0 0.0
    %1694 = vmatpush1.msra.mxu0 0.0
    %1695 = vmatprep.subr.mxu0 0.0
    %1696 = vmatpush1.msra.mxu0 0.0
    %1697 = vmatprep.subr.mxu0 0.0
    %1698 = vmatpush1.msra.mxu0 0.0
    %1699 = vmatprep.subr.mxu0 0.0
    %1700 = vmatpush1.msra.mxu0 0.0
    %1701 = vmatprep.subr.mxu0 0.0
    %1702 = vmatpush1.msra.mxu0 0.0
    %1703 = vmatprep.subr.mxu0 0.0
    %1704 = vmatpush1.msra.mxu0 0.0
    %1705 = vmatprep.subr.mxu0 0.0
    %1706 = vmatpush1.msra.mxu0 0.0
    %1707 = vmatprep.subr.mxu0 0.0
    %1708 = vmatpush1.msra.mxu0 0.0
    %1709 = vmatprep.subr.mxu0 0.0
    %1710 = vmatpush1.msra.mxu0 0.0
    %1711 = vmatprep.subr.mxu0 0.0
    %1712 = vmatpush1.msra.mxu0 0.0
    %1713 = vmatprep.subr.mxu0 0.0
    %1714 = vmatpush1.msra.mxu0 0.0
    %1715 = vmatprep.subr.mxu0 0.0
    %1716 = vmatpush1.msra.mxu0 0.0
    %1717 = vmatprep.subr.mxu0 0.0
    %1718 = vmatpush1.msra.mxu0 0.0
    %1719 = vmatprep.subr.mxu0 0.0
    %1720 = vmatpush1.msra.mxu0 0.0
    %1721 = vmatprep.subr.mxu0 0.0
    %1722 = vmatpush1.msra.mxu0 0.0
    %1723 = vmatprep.subr.mxu0 0.0
    %1724 = vmatpush1.msra.mxu0 0.0
    %1725 = vmatprep.mubr.f32.mxu0 0.0
    %1726 = vmatmul.mubr.f32.gmra.mrb[0].mxu0 %v1656
    %v1727 = vpop.f32.mrb[0].mxu0
    %v1728 = vadd.f32 %v1653, %v1727
    %v1729 = vpop.f32.mrb[0].mxu0
    %1730 = vmatprep.mubr.f32.mxu0 0.0
    %1731 = vmatmul.mubr.f32.gmra.mrb[0].mxu0 %v1659
    %v1732 = vpop.f32.mrb[0].mxu0
    %v1733 = vadd.f32 %v1653, %v1732
    %v1734 = vpop.f32.mrb[0].mxu0
    %1735 = vdwg.mxu0
    %v1736 = vmax.f32 %v1728, 0.0
    %v1737 = vmax.f32 %v1733, 0.0
    %v1738 = vld [vmem:[%s7] sm:$0xff]
    %v1739 = vld [vmem:[%s7 + $0x8] sm:$0xff]
    %v1740 = vld [vmem:[%s7 + $0x10] sm:$0xff]
    %v1741 = vld [vmem:[%s7 + $0x18] sm:$0xff]
    %v1742 = vld [vmem:[%s7 + $0x20] sm:$0xff]
    %v1743 = vld [vmem:[%s7 + $0x28] sm:$0xff]
    %v1744 = vld [vmem:[%s7 + $0x30] sm:$0xff]
    %v1745 = vld [vmem:[%s7 + $0x38] sm:$0xff]
    %v1746 = vld [vmem:[%s8] sm:$0x1]
    %v1748 = vlaneseq
    %v1749 = vshrl.u32 %v1748, 7
    %v1750 = vsub.s32 0, %v1749
    %v1751 = vrot.slane %v1746, %v1750
    %vm1753 = vcmask 523264
    %v1755 = vsel %vm1753, %v1736, 0
    %v1758 = vsel %vm1753, %v1737, 0
    %1760 = vmatprep.subr.mxu0 0.0
    %1761 = vmatpush1.msra.mxu0 %v1738
    %1762 = vmatprep.subr.mxu0 0.0
    %1763 = vmatpush1.msra.mxu0 %v1739
    %1764 = vmatprep.subr.mxu0 0.0
    %1765 = vmatpush1.msra.mxu0 %v1740
    %1766 = vmatprep.subr.mxu0 0.0
    %1767 = vmatpush1.msra.mxu0 %v1741
    %1768 = vmatprep.subr.mxu0 0.0
    %1769 = vmatpush1.msra.mxu0 %v1742
    %1770 = vmatprep.subr.mxu0 0.0
    %1771 = vmatpush1.msra.mxu0 %v1743
    %1772 = vmatprep.subr.mxu0 0.0
    %1773 = vmatpush1.msra.mxu0 %v1744
    %1774 = vmatprep.subr.mxu0 0.0
    %1775 = vmatpush1.msra.mxu0 %v1745
    %1776 = vmatprep.subr.mxu0 0.0
    %1777 = vmatpush1.msra.mxu0 0.0
    %1778 = vmatprep.subr.mxu0 0.0
    %1779 = vmatpush1.msra.mxu0 0.0
    %1780 = vmatprep.subr.mxu0 0.0
    %1781 = vmatpush1.msra.mxu0 0.0
    %1782 = vmatprep.subr.mxu0 0.0
    %1783 = vmatpush1.msra.mxu0 0.0
    %1784 = vmatprep.subr.mxu0 0.0
    %1785 = vmatpush1.msra.mxu0 0.0
    %1786 = vmatprep.subr.mxu0 0.0
    %1787 = vmatpush1.msra.mxu0 0.0
    %1788 = vmatprep.subr.mxu0 0.0
    %1789 = vmatpush1.msra.mxu0 0.0
    %1790 = vmatprep.subr.mxu0 0.0
    %1791 = vmatpush1.msra.mxu0 0.0
    %1792 = vmatprep.subr.mxu0 0.0
    %1793 = vmatpush1.msra.mxu0 0.0
    %1794 = vmatprep.subr.mxu0 0.0
    %1795 = vmatpush1.msra.mxu0 0.0
    %1796 = vmatprep.subr.mxu0 0.0
    %1797 = vmatpush1.msra.mxu0 0.0
    %1798 = vmatprep.subr.mxu0 0.0
    %1799 = vmatpush1.msra.mxu0 0.0
    %1800 = vmatprep.subr.mxu0 0.0
    %1801 = vmatpush1.msra.mxu0 0.0
    %1802 = vmatprep.subr.mxu0 0.0
    %1803 = vmatpush1.msra.mxu0 0.0
    %1804 = vmatprep.subr.mxu0 0.0
    %1805 = vmatpush1.msra.mxu0 0.0
    %1806 = vmatprep.subr.mxu0 0.0
    %1807 = vmatpush1.msra.mxu0 0.0
    %1808 = vmatprep.subr.mxu0 0.0
    %1809 = vmatpush1.msra.mxu0 0.0
    %1810 = vmatprep.subr.mxu0 0.0
    %1811 = vmatpush1.msra.mxu0 0.0
    %1812 = vmatprep.subr.mxu0 0.0
    %1813 = vmatpush1.msra.mxu0 0.0
    %1814 = vmatprep.subr.mxu0 0.0
    %1815 = vmatpush1.msra.mxu0 0.0
    %1816 = vmatprep.subr.mxu0 0.0
    %1817 = vmatpush1.msra.mxu0 0.0
    %1818 = vmatprep.subr.mxu0 0.0
    %1819 = vmatpush1.msra.mxu0 0.0
    %1820 = vmatprep.subr.mxu0 0.0
    %1821 = vmatpush1.msra.mxu0 0.0
    %1822 = vmatprep.subr.mxu0 0.0
    %1823 = vmatpush1.msra.mxu0 0.0
    %1824 = vmatprep.mubr.f32.mxu0 0.0
    %1825 = vmatmul.mubr.f32.gmra.mrb[0].mxu0 %v1755
    %v1826 = vpop.f32.mrb[0].mxu0
    %v1827 = vadd.f32 %v1751, %v1826
    %v1828 = vpop.f32.mrb[0].mxu0
    %1829 = vmatprep.mubr.f32.mxu0 0.0
    %1830 = vmatmul.mubr.f32.gmra.mrb[0].mxu0 %v1758
    %v1831 = vpop.f32.mrb[0].mxu0
    %v1832 = vadd.f32 %v1751, %v1831
    %v1833 = vpop.f32.mrb[0].mxu0
    %1834 = vdwg.mxu0
    %v1835 = vadd.f32 %v1642, %v1827
    %v1836 = vadd.f32 %v1643, %v1832
    %v1837 = vld [vmem:[%s11] sm:$0x1]
    %v1838 = vld [vmem:[%s12] sm:$0x1]
    %v1839 = vsel %vm72, %v1835, 0.0
    %1840 = vadd.xlane.f32.xlu0 %v1839
    %v1841 = vpop.xlane.xlu0 %1840
    %v1842 = vsel %vm72, %v1836, 0.0
    %1843 = vadd.xlane.f32.xlu0 %v1842
    %v1844 = vpop.xlane.xlu0 %1843
    %v1845 = vmul.f32 %v1841, %v1607
    %v1846 = vmul.f32 %v1844, %v1607
    %v1847 = vsub.f32 %v1835, %v1845
    %v1848 = vsub.f32 %v1836, %v1846
    %v1849 = vmul.f32 %v1847, %v1847
    %v1850 = vmul.f32 %v1848, %v1848
    %v1851 = vsel %vm72, %v1849, 0.0
    %1852 = vadd.xlane.f32.xlu0 %v1851
    %v1853 = vpop.xlane.xlu0 %1852
    %v1854 = vsel %vm72, %v1850, 0.0
    %1855 = vadd.xlane.f32.xlu0 %v1854
    %v1856 = vpop.xlane.xlu0 %1855
    %v1857 = vmul.f32 %v1853, %v1607
    %v1858 = vmul.f32 %v1856, %v1607
    %v1859 = vadd.f32 %v1857, 1e-05
    %v1860 = vadd.f32 %v1858, 1e-05
    %v1861 = vrsqrt.pop %v1859
    %v1862 = vrsqrt.pop %v1860
    %v1863 = vmul.f32 %v1847, %v1861
    %v1864 = vmul.f32 %v1848, %v1862
    %v1866 = vlaneseq
    %v1867 = vshrl.u32 %v1866, 7
    %v1868 = vsub.s32 0, %v1867
    %v1869 = vrot.slane %v1837, %v1868
    %v1871 = vmul.f32 %v1863, %v1869
    %v1872 = vmul.f32 %v1864, %v1869
    %v1874 = vlaneseq
    %v1875 = vshrl.u32 %v1874, 7
    %v1876 = vsub.s32 0, %v1875
    %v1877 = vrot.slane %v1838, %v1876
    %v1879 = vadd.f32 %v1871, %v1877
    %v1880 = vadd.f32 %v1872, %v1877
    %1881 = vst.msk [vmem:[#allocation5] sm:$0xff] %vm72, %v1879
    %1882 = vst.msk [vmem:[#allocation5 + $0x8] sm:$0xff] %vm72, %v1880
    // Predicated region
    $region58: #{tpu_custom_call.1} parent=1 // pred_check
      _
    $region59: #{tpu_custom_call.1} parent=1 // pred_check_branch
      %1884 = sbr.rel (0) target = $region61
    $region60: #{tpu_custom_call.1} parent=1 // pred_region
      %s1886 = ssub.s32 256, 256
      %1887 = vsyncadd [#allocation4], %s1886
      %s1888 = sshll.u32 [#allocation5], 4
      %s1889 = int_to_ptr.vmem [resolvable:$true] %s1888
      %1894 = dma.vmem_to_hbm [thread:$0]  %s1889, 256, %s13, [#allocation4], 128, 128, 8
    $region61: #{tpu_custom_call.1} parent=1 // pred_fallthru
      _
    // Predicated region
    $region62: #{tpu_custom_call.1} parent=1 // pred_check
      _
    $region63: #{tpu_custom_call.1} parent=1 // pred_check_branch
      %1896 = sbr.rel (0) target = $region65
    $region64: #{tpu_custom_call.1} parent=1 // pred_region
      %1897 = dma.done [#allocation4], 256
    $region65: #{tpu_custom_call.1} parent=1 // pred_fallthru
      _
    %1898 = vsyncpa [#allocation3], 1
    %1899 = vsyncpa [#allocation4], 1

</llo_original>
